<compile_context>
chip_gen: v7x
topology: tpu7x:2x2x1
jax: 0.10.0
libtpu: 0.0.40
codegen_flags: <defaults>
</compile_context>

<pallas_src>
import math

import jax
import jax.numpy as jnp
import numpy as np
from jax import lax
from jax.experimental import pallas as pl
from jax.experimental.pallas import tpu as pltpu


def _round_up(x: int, m: int) -> int:
    return ((x + m - 1) // m) * m


def _pick_time_chunk(seq_len: int, target: int = 32) -> int:
    """Largest divisor of seq_len that is <= target (keeps padding-free chunks)."""
    for c in range(min(seq_len, target), 0, -1):
        if seq_len % c == 0:
            return c
    return seq_len


def _pad2(a, rows: int, cols: int):
    return jnp.pad(a, ((0, rows - a.shape[0]), (0, cols - a.shape[1])))


def _make_kernel(num_layers: int, T: int, B_pad: int, H_pad: int, mxu_dtype):
    n_deep = num_layers - 1

    def kernel(*args):
        x_ref = args[0]                        # (T*B_pad, D_pad)  mxu_dtype
        wxh0_ref, b0_ref, whh0_ref = args[1:4]
        deep_refs = args[4:4 + 2 * n_deep]     # (W_cat_l, b_l) for l = 1..L-1
        wfc_ref = args[4 + 2 * n_deep]         # (1, H_pad) f32
        bfc_ref = args[5 + 2 * n_deep]         # (1, 1)     f32
        out_ref = args[6 + 2 * n_deep]         # (B_pad, 1) f32
        h_ref = args[7 + 2 * n_deep]           # (L, B_pad, H_pad) f32 scratch
        xp_ref = args[8 + 2 * n_deep]          # (T*B_pad, H_pad)  f32 scratch

        step = pl.program_id(0)

        @pl.when(step == 0)
        def _():
            h_ref[...] = jnp.zeros_like(h_ref)

        # --- hoisted layer-0 input projection for the whole time chunk -------
        # One MXU-efficient GEMM with M = T*B_pad instead of T tiny matmuls.
        xp_ref[...] = (
            jnp.dot(x_ref[...], wxh0_ref[...], preferred_element_type=jnp.float32)
            + b0_ref[...]
        )

        # --- hoist weight loads and bias broadcasts out of the time loop -----
        whh0 = whh0_ref[...]
        deep_w = [deep_refs[2 * i][...] for i in range(n_deep)]
        deep_b = [jnp.broadcast_to(deep_refs[2 * i + 1][...], (B_pad, H_pad))
                  for i in range(n_deep)]

        def body(t, carry):
            row = pl.multiple_of(t * B_pad, B_pad)
            # layer 0: only the (B,H) x (H,H) recurrent matmul remains per step.
            h0_prev = h_ref[0].astype(mxu_dtype)
            pre = xp_ref[pl.ds(row, B_pad), :] + jnp.dot(
                h0_prev, whh0, preferred_element_type=jnp.float32)
            h_new = jnp.tanh(pre)
            h_ref[0] = h_new
            inp = h_new
            # layers >= 1: fused [inp | h_prev] @ [W_xh ; W_hh] matmul.
            for l in range(1, num_layers):
                h_prev = h_ref[l].astype(mxu_dtype)
                cat = jnp.concatenate([inp.astype(mxu_dtype), h_prev], axis=-1)
                pre = jnp.dot(cat, deep_w[l - 1],
                              preferred_element_type=jnp.float32) + deep_b[l - 1]
                h_new = jnp.tanh(pre)
                h_ref[l] = h_new
                inp = h_new
            return carry

        lax.fori_loop(0, T, body, None, unroll=True)

        # --- fc head: VPU multiply + lane reduction (avoids lane-sparse N=1 MXU)
        @pl.when(step == pl.num_programs(0) - 1)
        def _():
            h_last = h_ref[num_layers - 1]
            out_ref[...] = (
                jnp.sum(h_last * wfc_ref[...], axis=-1, keepdims=True)
                + bfc_ref[...]
            )

    return kernel


def man_rnn_forward(x, params, *, time_chunk=None, mxu_dtype=jnp.bfloat16):
    """x: (batch, seq, input_size) f32 -> (batch, 1) f32."""
    B, S, D = x.shape
    num_layers = len(params["wxh"])
    H = params["wxh"][0].shape[1]

    # Lane/sublane-dense padded shapes.
    B_pad = _round_up(max(B, 8), 16)
    D_pad = _round_up(D, 128)
    H_pad = _round_up(H, 128)

    T = time_chunk if (time_chunk is not None and S % time_chunk == 0) \
        else _pick_time_chunk(S)

    # Time-major, padded, flattened to (S*B_pad, D_pad) so each grid step's block
    # is one contiguous (T*B_pad, D_pad) chunk (auto double-buffered DMA).
    x_tm = jnp.transpose(x, (1, 0, 2)).astype(jnp.float32)
    x_tm = jnp.pad(x_tm, ((0, 0), (0, B_pad - B), (0, D_pad - D)))
    x2d = x_tm.reshape(S * B_pad, D_pad).astype(mxu_dtype)

    # --- pack weights: bf16 MXU inputs, f32 biases ----------------------------
    f32 = jnp.float32
    wxh0 = _pad2(params["wxh"][0], D_pad, H_pad).astype(mxu_dtype)
    b0 = _pad2(params["bxh"][0], 1, H_pad).astype(f32)
    whh0 = _pad2(params["whh"][0], H_pad, H_pad).astype(mxu_dtype)
    flat_weights = [wxh0, b0, whh0]
    for l in range(1, num_layers):
        w_cat = jnp.concatenate(
            [_pad2(params["wxh"][l], H_pad, H_pad),
             _pad2(params["whh"][l], H_pad, H_pad)], axis=0).astype(mxu_dtype)
        b_l = _pad2(params["bxh"][l], 1, H_pad).astype(f32)
        flat_weights += [w_cat, b_l]
    wfc_row = _pad2(params["wfc"].T, 1, H_pad).astype(f32)   # (1, H_pad)
    bfc = params["bfc"].astype(f32)                          # (1, 1)
    flat_weights += [wfc_row, bfc]

    # --- specs ----------------------------------------------------------------
    def full_spec(arr):
        nd = arr.ndim
        return pl.BlockSpec(arr.shape, lambda i: (0,) * nd)   # resident, no re-DMA

    in_specs = [pl.BlockSpec((T * B_pad, D_pad), lambda i: (i, 0))]
    in_specs += [full_spec(w) for w in flat_weights]

    scratch_shapes = [
        pltpu.VMEM((num_layers, B_pad, H_pad), jnp.float32),  # hidden state (persists)
        pltpu.VMEM((T * B_pad, H_pad), jnp.float32),          # layer-0 x projection
    ]

    # explicit VMEM budget: weights + 2 double-buffered x chunks + scratch + head.
    need = sum(int(w.size) * w.dtype.itemsize for w in flat_weights)
    need += 2 * (T * B_pad * D_pad) * np.dtype(mxu_dtype).itemsize
    need += (num_layers + T) * B_pad * H_pad * 4
    need += B_pad * 4
    vmem_limit = int(min(64 << 20, max(need + (8 << 20), 32 << 20)))

    kernel = _make_kernel(num_layers, T, B_pad, H_pad, mxu_dtype)

    out = pl.pallas_call(
        kernel,
        out_shape=jax.ShapeDtypeStruct((B_pad, 1), jnp.float32),
        grid_spec=pltpu.PrefetchScalarGridSpec(
            num_scalar_prefetch=0,
            grid=(S // T,),
            in_specs=in_specs,
            out_specs=pl.BlockSpec((B_pad, 1), lambda i: (0, 0)),
            scratch_shapes=scratch_shapes,
        ),
        compiler_params=pltpu.CompilerParams(
            dimension_semantics=("arbitrary",),   # recurrence is sequential in time
            vmem_limit_bytes=vmem_limit,
        ),
    )(x2d, *flat_weights)

    return out[:B]


def man_rnn_reference(x, params, mxu_dtype=jnp.bfloat16):
    """Pure-JAX reference mirroring the PyTorch forward (dtype-aware: bf16 MXU
    inputs with f32 accumulation, matching the kernel's matmul precision)."""
    B, S, D = x.shape
    num_layers = len(params["wxh"])
    H = params["wxh"][0].shape[1]

    def mm(a, w):
        return jnp.dot(a.astype(mxu_dtype), w.astype(mxu_dtype),
                       preferred_element_type=jnp.float32)

    h = [jnp.zeros((B, H), jnp.float32) for _ in range(num_layers)]
    for t in range(S):
        inp = x[:, t, :]
        for l in range(num_layers):
            h[l] = jnp.tanh(mm(inp, params["wxh"][l]) + params["bxh"][l]
                            + mm(h[l], params["whh"][l]))
            inp = h[l]
    return h[-1] @ params["wfc"] + params["bfc"]


def init_params(key, input_size, hidden_size, num_layers):
    """Deterministic parameter init (right-multiply form of the nn.Linear layers)."""
    params = {"wxh": [], "bxh": [], "whh": []}
    keys = jax.random.split(key, 3 * num_layers + 2)
    k = 0
    for l in range(num_layers):
        in_l = input_size if l == 0 else hidden_size
        params["wxh"].append(
            0.1 * jax.random.normal(keys[k], (in_l, hidden_size), jnp.float32)); k += 1
        params["bxh"].append(
            0.1 * jax.random.normal(keys[k], (1, hidden_size), jnp.float32)); k += 1
        params["whh"].append(
            0.1 * jax.random.normal(keys[k], (hidden_size, hidden_size), jnp.float32)); k += 1
    params["wfc"] = 0.1 * jax.random.normal(keys[k], (hidden_size, 1), jnp.float32); k += 1
    params["bfc"] = 0.1 * jax.random.normal(keys[k], (1, 1), jnp.float32); k += 1
    return params


if __name__ == "__main__":
    batch, seq_len, input_size = 2, 8, 4
    hidden_size, num_layers = 32, 2

    key = jax.random.PRNGKey(0)
    kx, kp = jax.random.split(key)
    x = jax.random.normal(kx, (batch, seq_len, input_size), jnp.float32)
    params = init_params(kp, input_size, hidden_size, num_layers)

    # time_chunk=4 -> grid=(2,) so the chunked pipeline + pl.when init gating
    # are actually exercised even at this tiny demo size.
    out = jax.block_until_ready(man_rnn_forward(x, params, time_chunk=4))

    ref = man_rnn_reference(x, params)
    assert out.shape == (batch, 1), out.shape
    assert jnp.allclose(out, ref, atol=5e-3, rtol=5e-3), (out, ref)

    print("KERNEL_OK")
</pallas_src>

<mosaic_0001>
module attributes {stable_mosaic.version = 11 : i64} {
  func.func @kernel(%arg0: i32, %arg1: memref<64x128xbf16, #tpu.memory_space<vmem>>, %arg2: memref<128x128xbf16, #tpu.memory_space<vmem>>, %arg3: memref<1x128xf32, #tpu.memory_space<vmem>>, %arg4: memref<128x128xbf16, #tpu.memory_space<vmem>>, %arg5: memref<256x128xbf16, #tpu.memory_space<vmem>>, %arg6: memref<1x128xf32, #tpu.memory_space<vmem>>, %arg7: memref<1x128xf32, #tpu.memory_space<vmem>>, %arg8: memref<1x1xf32, #tpu.memory_space<vmem>>, %arg9: memref<16x1xf32, #tpu.memory_space<vmem>>, %arg10: memref<2x16x128xf32, #tpu.memory_space<vmem>>, %arg11: memref<64x128xf32, #tpu.memory_space<vmem>>) attributes {dimension_semantics = [#tpu.dimension_semantics<arbitrary>], iteration_bounds = array<i64: 2>, scalar_prefetch = 0 : i64, scratch_operands = 2 : i64, tpu.core_type = #tpu.core_type<tc>, window_params = [{transform_indices = @transform_0, window_bounds = array<i64: 64, 128>}, {pipeline_mode = #tpu.pipeline_mode<synchronous>, transform_indices = @transform_1, window_bounds = array<i64: 128, 128>}, {pipeline_mode = #tpu.pipeline_mode<synchronous>, transform_indices = @transform_2, window_bounds = array<i64: 1, 128>}, {pipeline_mode = #tpu.pipeline_mode<synchronous>, transform_indices = @transform_3, window_bounds = array<i64: 128, 128>}, {pipeline_mode = #tpu.pipeline_mode<synchronous>, transform_indices = @transform_4, window_bounds = array<i64: 256, 128>}, {pipeline_mode = #tpu.pipeline_mode<synchronous>, transform_indices = @transform_5, window_bounds = array<i64: 1, 128>}, {pipeline_mode = #tpu.pipeline_mode<synchronous>, transform_indices = @transform_6, window_bounds = array<i64: 1, 128>}, {pipeline_mode = #tpu.pipeline_mode<synchronous>, transform_indices = @transform_7, window_bounds = array<i64: 1, 1>}, {pipeline_mode = #tpu.pipeline_mode<synchronous>, transform_indices = @transform_8, window_bounds = array<i64: 16, 1>}]} {
    %c0_i32 = arith.constant 0 : i32
    %0 = arith.cmpi eq, %arg0, %c0_i32 : i32
    %1 = arith.extui %0 : i1 to i32
    %c0_i32_0 = arith.constant 0 : i32
    %2 = arith.cmpi ne, %1, %c0_i32_0 : i32
    scf.if %2 {
      %cst_79 = arith.constant 0.000000e+00 : f32
      %114 = vector.broadcast %cst_79 : f32 to vector<2x16x128xf32>
      %c0_80 = arith.constant 0 : index
      %c0_81 = arith.constant 0 : index
      %c0_82 = arith.constant 0 : index
      %115 = vector.load %arg10[%c0_80, %c0_81, %c0_82] : memref<2x16x128xf32, #tpu.memory_space<vmem>>, vector<2x16x128xf32>
      tpu.vector_store %arg10[%c0_80, %c0_81, %c0_82], %114 {strides = array<i32>} : memref<2x16x128xf32, #tpu.memory_space<vmem>>, vector<2x16x128xf32>,
    } else {
    }
    %c0 = arith.constant 0 : index
    %c0_1 = arith.constant 0 : index
    %3 = vector.load %arg1[%c0, %c0_1] : memref<64x128xbf16, #tpu.memory_space<vmem>>, vector<64x128xbf16>
    %c0_2 = arith.constant 0 : index
    %c0_3 = arith.constant 0 : index
    %4 = vector.load %arg2[%c0_2, %c0_3] : memref<128x128xbf16, #tpu.memory_space<vmem>>, vector<128x128xbf16>
    %cst = arith.constant dense<0.000000e+00> : vector<64x128xf32>
    %5 = tpu.matmul %3, %4, %cst {dimension_numbers = #tpu.dot_dimension_numbers<[1], [0], [0], [1], [0, 0, 1, 1], [], []>} : vector<64x128xbf16>, vector<128x128xbf16>, vector<64x128xf32> -> vector<64x128xf32>
    %c0_4 = arith.constant 0 : index
    %c0_5 = arith.constant 0 : index
    %6 = vector.load %arg3[%c0_4, %c0_5] : memref<1x128xf32, #tpu.memory_space<vmem>>, vector<1x128xf32>
    %7 = vector.broadcast %6 : vector<1x128xf32> to vector<64x128xf32>
    %8 = arith.addf %5, %7 : vector<64x128xf32>
    %c0_6 = arith.constant 0 : index
    %c0_7 = arith.constant 0 : index
    %9 = vector.load %arg11[%c0_6, %c0_7] : memref<64x128xf32, #tpu.memory_space<vmem>>, vector<64x128xf32>
    tpu.vector_store %arg11[%c0_6, %c0_7], %8 {strides = array<i32>} : memref<64x128xf32, #tpu.memory_space<vmem>>, vector<64x128xf32>,
    %c0_8 = arith.constant 0 : index
    %c0_9 = arith.constant 0 : index
    %10 = vector.load %arg4[%c0_8, %c0_9] : memref<128x128xbf16, #tpu.memory_space<vmem>>, vector<128x128xbf16>
    %c0_10 = arith.constant 0 : index
    %c0_11 = arith.constant 0 : index
    %11 = vector.load %arg5[%c0_10, %c0_11] : memref<256x128xbf16, #tpu.memory_space<vmem>>, vector<256x128xbf16>
    %c0_12 = arith.constant 0 : index
    %c0_13 = arith.constant 0 : index
    %12 = vector.load %arg6[%c0_12, %c0_13] : memref<1x128xf32, #tpu.memory_space<vmem>>, vector<1x128xf32>
    %13 = vector.shape_cast %12 : vector<1x128xf32> to vector<1x128xf32>
    %14 = vector.broadcast %13 : vector<1x128xf32> to vector<16x128xf32>
    %c0_i32_14 = arith.constant 0 : i32
    %c16_i32 = arith.constant 16 : i32
    %15 = arith.muli %c0_i32_14, %c16_i32 : i32
    %16 = tpu.assume_multiple %15, 16 : i32
    %c0_15 = arith.constant 0 : index
    %c0_16 = arith.constant 0 : index
    %c0_17 = arith.constant 0 : index
    %17 = vector.load %arg10[%c0_15, %c0_16, %c0_17] : memref<2x16x128xf32, #tpu.memory_space<vmem>>, vector<1x16x128xf32>
    %18 = vector.shape_cast %17 : vector<1x16x128xf32> to vector<16x128xf32>
    %19 = arith.truncf %18 : vector<16x128xf32> to vector<16x128xbf16>
    %20 = arith.index_cast %16 : i32 to index
    %c0_18 = arith.constant 0 : index
    %21 = vector.load %arg11[%20, %c0_18] : memref<64x128xf32, #tpu.memory_space<vmem>>, vector<16x128xf32>
    %cst_19 = arith.constant dense<0.000000e+00> : vector<16x128xf32>
    %22 = tpu.matmul %19, %10, %cst_19 {dimension_numbers = #tpu.dot_dimension_numbers<[1], [0], [0], [1], [0, 0, 1, 1], [], []>} : vector<16x128xbf16>, vector<128x128xbf16>, vector<16x128xf32> -> vector<16x128xf32>
    %23 = arith.addf %21, %22 : vector<16x128xf32>
    %24 = math.tanh %23 : vector<16x128xf32>
    %c0_20 = arith.constant 0 : index
    %c0_21 = arith.constant 0 : index
    %c0_22 = arith.constant 0 : index
    %25 = vector.load %arg10[%c0_20, %c0_21, %c0_22] : memref<2x16x128xf32, #tpu.memory_space<vmem>>, vector<1x16x128xf32>
    %26 = vector.shape_cast %25 : vector<1x16x128xf32> to vector<16x128xf32>
    %27 = vector.shape_cast %24 : vector<16x128xf32> to vector<1x16x128xf32>
    tpu.vector_store %arg10[%c0_20, %c0_21, %c0_22], %27 {strides = array<i32>} : memref<2x16x128xf32, #tpu.memory_space<vmem>>, vector<1x16x128xf32>,
    %c1 = arith.constant 1 : index
    %c0_23 = arith.constant 0 : index
    %c0_24 = arith.constant 0 : index
    %28 = vector.load %arg10[%c1, %c0_23, %c0_24] : memref<2x16x128xf32, #tpu.memory_space<vmem>>, vector<1x16x128xf32>
    %29 = vector.shape_cast %28 : vector<1x16x128xf32> to vector<16x128xf32>
    %30 = arith.truncf %29 : vector<16x128xf32> to vector<16x128xbf16>
    %31 = arith.truncf %24 : vector<16x128xf32> to vector<16x128xbf16>
    %32 = tpu.concatenate %31, %30 in 1 : vector<16x128xbf16>, vector<16x128xbf16> -> vector<16x256xbf16>
    %cst_25 = arith.constant dense<0.000000e+00> : vector<16x128xf32>
    %33 = tpu.matmul %32, %11, %cst_25 {dimension_numbers = #tpu.dot_dimension_numbers<[1], [0], [0], [1], [0, 0, 1, 1], [], []>} : vector<16x256xbf16>, vector<256x128xbf16>, vector<16x128xf32> -> vector<16x128xf32>
    %34 = arith.addf %33, %14 : vector<16x128xf32>
    %35 = math.tanh %34 : vector<16x128xf32>
    %c1_26 = arith.constant 1 : index
    %c0_27 = arith.constant 0 : index
    %c0_28 = arith.constant 0 : index
    %36 = vector.load %arg10[%c1_26, %c0_27, %c0_28] : memref<2x16x128xf32, #tpu.memory_space<vmem>>, vector<1x16x128xf32>
    %37 = vector.shape_cast %36 : vector<1x16x128xf32> to vector<16x128xf32>
    %38 = vector.shape_cast %35 : vector<16x128xf32> to vector<1x16x128xf32>
    tpu.vector_store %arg10[%c1_26, %c0_27, %c0_28], %38 {strides = array<i32>} : memref<2x16x128xf32, #tpu.memory_space<vmem>>, vector<1x16x128xf32>,
    %c1_i32 = arith.constant 1 : i32
    %c16_i32_29 = arith.constant 16 : i32
    %39 = arith.muli %c1_i32, %c16_i32_29 : i32
    %40 = tpu.assume_multiple %39, 16 : i32
    %c0_30 = arith.constant 0 : index
    %c0_31 = arith.constant 0 : index
    %c0_32 = arith.constant 0 : index
    %41 = vector.load %arg10[%c0_30, %c0_31, %c0_32] : memref<2x16x128xf32, #tpu.memory_space<vmem>>, vector<1x16x128xf32>
    %42 = vector.shape_cast %41 : vector<1x16x128xf32> to vector<16x128xf32>
    %43 = arith.truncf %42 : vector<16x128xf32> to vector<16x128xbf16>
    %44 = arith.index_cast %40 : i32 to index
    %c0_33 = arith.constant 0 : index
    %45 = vector.load %arg11[%44, %c0_33] : memref<64x128xf32, #tpu.memory_space<vmem>>, vector<16x128xf32>
    %cst_34 = arith.constant dense<0.000000e+00> : vector<16x128xf32>
    %46 = tpu.matmul %43, %10, %cst_34 {dimension_numbers = #tpu.dot_dimension_numbers<[1], [0], [0], [1], [0, 0, 1, 1], [], []>} : vector<16x128xbf16>, vector<128x128xbf16>, vector<16x128xf32> -> vector<16x128xf32>
    %47 = arith.addf %45, %46 : vector<16x128xf32>
    %48 = math.tanh %47 : vector<16x128xf32>
    %c0_35 = arith.constant 0 : index
    %c0_36 = arith.constant 0 : index
    %c0_37 = arith.constant 0 : index
    %49 = vector.load %arg10[%c0_35, %c0_36, %c0_37] : memref<2x16x128xf32, #tpu.memory_space<vmem>>, vector<1x16x128xf32>
    %50 = vector.shape_cast %49 : vector<1x16x128xf32> to vector<16x128xf32>
    %51 = vector.shape_cast %48 : vector<16x128xf32> to vector<1x16x128xf32>
    tpu.vector_store %arg10[%c0_35, %c0_36, %c0_37], %51 {strides = array<i32>} : memref<2x16x128xf32, #tpu.memory_space<vmem>>, vector<1x16x128xf32>,
    %c1_38 = arith.constant 1 : index
    %c0_39 = arith.constant 0 : index
    %c0_40 = arith.constant 0 : index
    %52 = vector.load %arg10[%c1_38, %c0_39, %c0_40] : memref<2x16x128xf32, #tpu.memory_space<vmem>>, vector<1x16x128xf32>
    %53 = vector.shape_cast %52 : vector<1x16x128xf32> to vector<16x128xf32>
    %54 = arith.truncf %53 : vector<16x128xf32> to vector<16x128xbf16>
    %55 = arith.truncf %48 : vector<16x128xf32> to vector<16x128xbf16>
    %56 = tpu.concatenate %55, %54 in 1 : vector<16x128xbf16>, vector<16x128xbf16> -> vector<16x256xbf16>
    %cst_41 = arith.constant dense<0.000000e+00> : vector<16x128xf32>
    %57 = tpu.matmul %56, %11, %cst_41 {dimension_numbers = #tpu.dot_dimension_numbers<[1], [0], [0], [1], [0, 0, 1, 1], [], []>} : vector<16x256xbf16>, vector<256x128xbf16>, vector<16x128xf32> -> vector<16x128xf32>
    %58 = arith.addf %57, %14 : vector<16x128xf32>
    %59 = math.tanh %58 : vector<16x128xf32>
    %c1_42 = arith.constant 1 : index
    %c0_43 = arith.constant 0 : index
    %c0_44 = arith.constant 0 : index
    %60 = vector.load %arg10[%c1_42, %c0_43, %c0_44] : memref<2x16x128xf32, #tpu.memory_space<vmem>>, vector<1x16x128xf32>
    %61 = vector.shape_cast %60 : vector<1x16x128xf32> to vector<16x128xf32>
    %62 = vector.shape_cast %59 : vector<16x128xf32> to vector<1x16x128xf32>
    tpu.vector_store %arg10[%c1_42, %c0_43, %c0_44], %62 {strides = array<i32>} : memref<2x16x128xf32, #tpu.memory_space<vmem>>, vector<1x16x128xf32>,
    %c2_i32 = arith.constant 2 : i32
    %c16_i32_45 = arith.constant 16 : i32
    %63 = arith.muli %c2_i32, %c16_i32_45 : i32
    %64 = tpu.assume_multiple %63, 16 : i32
    %c0_46 = arith.constant 0 : index
    %c0_47 = arith.constant 0 : index
    %c0_48 = arith.constant 0 : index
    %65 = vector.load %arg10[%c0_46, %c0_47, %c0_48] : memref<2x16x128xf32, #tpu.memory_space<vmem>>, vector<1x16x128xf32>
    %66 = vector.shape_cast %65 : vector<1x16x128xf32> to vector<16x128xf32>
    %67 = arith.truncf %66 : vector<16x128xf32> to vector<16x128xbf16>
    %68 = arith.index_cast %64 : i32 to index
    %c0_49 = arith.constant 0 : index
    %69 = vector.load %arg11[%68, %c0_49] : memref<64x128xf32, #tpu.memory_space<vmem>>, vector<16x128xf32>
    %cst_50 = arith.constant dense<0.000000e+00> : vector<16x128xf32>
    %70 = tpu.matmul %67, %10, %cst_50 {dimension_numbers = #tpu.dot_dimension_numbers<[1], [0], [0], [1], [0, 0, 1, 1], [], []>} : vector<16x128xbf16>, vector<128x128xbf16>, vector<16x128xf32> -> vector<16x128xf32>
    %71 = arith.addf %69, %70 : vector<16x128xf32>
    %72 = math.tanh %71 : vector<16x128xf32>
    %c0_51 = arith.constant 0 : index
    %c0_52 = arith.constant 0 : index
    %c0_53 = arith.constant 0 : index
    %73 = vector.load %arg10[%c0_51, %c0_52, %c0_53] : memref<2x16x128xf32, #tpu.memory_space<vmem>>, vector<1x16x128xf32>
    %74 = vector.shape_cast %73 : vector<1x16x128xf32> to vector<16x128xf32>
    %75 = vector.shape_cast %72 : vector<16x128xf32> to vector<1x16x128xf32>
    tpu.vector_store %arg10[%c0_51, %c0_52, %c0_53], %75 {strides = array<i32>} : memref<2x16x128xf32, #tpu.memory_space<vmem>>, vector<1x16x128xf32>,
    %c1_54 = arith.constant 1 : index
    %c0_55 = arith.constant 0 : index
    %c0_56 = arith.constant 0 : index
    %76 = vector.load %arg10[%c1_54, %c0_55, %c0_56] : memref<2x16x128xf32, #tpu.memory_space<vmem>>, vector<1x16x128xf32>
    %77 = vector.shape_cast %76 : vector<1x16x128xf32> to vector<16x128xf32>
    %78 = arith.truncf %77 : vector<16x128xf32> to vector<16x128xbf16>
    %79 = arith.truncf %72 : vector<16x128xf32> to vector<16x128xbf16>
    %80 = tpu.concatenate %79, %78 in 1 : vector<16x128xbf16>, vector<16x128xbf16> -> vector<16x256xbf16>
    %cst_57 = arith.constant dense<0.000000e+00> : vector<16x128xf32>
    %81 = tpu.matmul %80, %11, %cst_57 {dimension_numbers = #tpu.dot_dimension_numbers<[1], [0], [0], [1], [0, 0, 1, 1], [], []>} : vector<16x256xbf16>, vector<256x128xbf16>, vector<16x128xf32> -> vector<16x128xf32>
    %82 = arith.addf %81, %14 : vector<16x128xf32>
    %83 = math.tanh %82 : vector<16x128xf32>
    %c1_58 = arith.constant 1 : index
    %c0_59 = arith.constant 0 : index
    %c0_60 = arith.constant 0 : index
    %84 = vector.load %arg10[%c1_58, %c0_59, %c0_60] : memref<2x16x128xf32, #tpu.memory_space<vmem>>, vector<1x16x128xf32>
    %85 = vector.shape_cast %84 : vector<1x16x128xf32> to vector<16x128xf32>
    %86 = vector.shape_cast %83 : vector<16x128xf32> to vector<1x16x128xf32>
    tpu.vector_store %arg10[%c1_58, %c0_59, %c0_60], %86 {strides = array<i32>} : memref<2x16x128xf32, #tpu.memory_space<vmem>>, vector<1x16x128xf32>,
    %c3_i32 = arith.constant 3 : i32
    %c16_i32_61 = arith.constant 16 : i32
    %87 = arith.muli %c3_i32, %c16_i32_61 : i32
    %88 = tpu.assume_multiple %87, 16 : i32
    %c0_62 = arith.constant 0 : index
    %c0_63 = arith.constant 0 : index
    %c0_64 = arith.constant 0 : index
    %89 = vector.load %arg10[%c0_62, %c0_63, %c0_64] : memref<2x16x128xf32, #tpu.memory_space<vmem>>, vector<1x16x128xf32>
    %90 = vector.shape_cast %89 : vector<1x16x128xf32> to vector<16x128xf32>
    %91 = arith.truncf %90 : vector<16x128xf32> to vector<16x128xbf16>
    %92 = arith.index_cast %88 : i32 to index
    %c0_65 = arith.constant 0 : index
    %93 = vector.load %arg11[%92, %c0_65] : memref<64x128xf32, #tpu.memory_space<vmem>>, vector<16x128xf32>
    %cst_66 = arith.constant dense<0.000000e+00> : vector<16x128xf32>
    %94 = tpu.matmul %91, %10, %cst_66 {dimension_numbers = #tpu.dot_dimension_numbers<[1], [0], [0], [1], [0, 0, 1, 1], [], []>} : vector<16x128xbf16>, vector<128x128xbf16>, vector<16x128xf32> -> vector<16x128xf32>
    %95 = arith.addf %93, %94 : vector<16x128xf32>
    %96 = math.tanh %95 : vector<16x128xf32>
    %c0_67 = arith.constant 0 : index
    %c0_68 = arith.constant 0 : index
    %c0_69 = arith.constant 0 : index
    %97 = vector.load %arg10[%c0_67, %c0_68, %c0_69] : memref<2x16x128xf32, #tpu.memory_space<vmem>>, vector<1x16x128xf32>
    %98 = vector.shape_cast %97 : vector<1x16x128xf32> to vector<16x128xf32>
    %99 = vector.shape_cast %96 : vector<16x128xf32> to vector<1x16x128xf32>
    tpu.vector_store %arg10[%c0_67, %c0_68, %c0_69], %99 {strides = array<i32>} : memref<2x16x128xf32, #tpu.memory_space<vmem>>, vector<1x16x128xf32>,
    %c1_70 = arith.constant 1 : index
    %c0_71 = arith.constant 0 : index
    %c0_72 = arith.constant 0 : index
    %100 = vector.load %arg10[%c1_70, %c0_71, %c0_72] : memref<2x16x128xf32, #tpu.memory_space<vmem>>, vector<1x16x128xf32>
    %101 = vector.shape_cast %100 : vector<1x16x128xf32> to vector<16x128xf32>
    %102 = arith.truncf %101 : vector<16x128xf32> to vector<16x128xbf16>
    %103 = arith.truncf %96 : vector<16x128xf32> to vector<16x128xbf16>
    %104 = tpu.concatenate %103, %102 in 1 : vector<16x128xbf16>, vector<16x128xbf16> -> vector<16x256xbf16>
    %cst_73 = arith.constant dense<0.000000e+00> : vector<16x128xf32>
    %105 = tpu.matmul %104, %11, %cst_73 {dimension_numbers = #tpu.dot_dimension_numbers<[1], [0], [0], [1], [0, 0, 1, 1], [], []>} : vector<16x256xbf16>, vector<256x128xbf16>, vector<16x128xf32> -> vector<16x128xf32>
    %106 = arith.addf %105, %14 : vector<16x128xf32>
    %107 = math.tanh %106 : vector<16x128xf32>
    %c1_74 = arith.constant 1 : index
    %c0_75 = arith.constant 0 : index
    %c0_76 = arith.constant 0 : index
    %108 = vector.load %arg10[%c1_74, %c0_75, %c0_76] : memref<2x16x128xf32, #tpu.memory_space<vmem>>, vector<1x16x128xf32>
    %109 = vector.shape_cast %108 : vector<1x16x128xf32> to vector<16x128xf32>
    %110 = vector.shape_cast %107 : vector<16x128xf32> to vector<1x16x128xf32>
    tpu.vector_store %arg10[%c1_74, %c0_75, %c0_76], %110 {strides = array<i32>} : memref<2x16x128xf32, #tpu.memory_space<vmem>>, vector<1x16x128xf32>,
    %c4_i32 = arith.constant 4 : i32
    %c1_i32_77 = arith.constant 1 : i32
    %111 = arith.cmpi eq, %arg0, %c1_i32_77 : i32
    %112 = arith.extui %111 : i1 to i32
    %c0_i32_78 = arith.constant 0 : i32
    %113 = arith.cmpi ne, %112, %c0_i32_78 : i32
    scf.if %113 {
      %c1_79 = arith.constant 1 : index
      %c0_80 = arith.constant 0 : index
      %c0_81 = arith.constant 0 : index
      %114 = vector.load %arg10[%c1_79, %c0_80, %c0_81] : memref<2x16x128xf32, #tpu.memory_space<vmem>>, vector<1x16x128xf32>
      %115 = vector.shape_cast %114 : vector<1x16x128xf32> to vector<16x128xf32>
      %c0_82 = arith.constant 0 : index
      %c0_83 = arith.constant 0 : index
      %116 = vector.load %arg7[%c0_82, %c0_83] : memref<1x128xf32, #tpu.memory_space<vmem>>, vector<1x128xf32>
      %117 = vector.broadcast %116 : vector<1x128xf32> to vector<16x128xf32>
      %118 = arith.mulf %115, %117 : vector<16x128xf32>
      %cst_84 = arith.constant dense<0.000000e+00> : vector<16xf32>
      %119 = vector.multi_reduction <add>, %118, %cst_84 [1] : vector<16x128xf32> to vector<16xf32>
      %120 = vector.shape_cast %119 : vector<16xf32> to vector<16x1xf32>
      %c0_85 = arith.constant 0 : index
      %c0_86 = arith.constant 0 : index
      %121 = vector.load %arg8[%c0_85, %c0_86] : memref<1x1xf32, #tpu.memory_space<vmem>>, vector<1x1xf32>
      %122 = vector.broadcast %121 : vector<1x1xf32> to vector<16x1xf32>
      %123 = arith.addf %120, %122 : vector<16x1xf32>
      %c0_87 = arith.constant 0 : index
      %c0_88 = arith.constant 0 : index
      %124 = vector.load %arg9[%c0_87, %c0_88] : memref<16x1xf32, #tpu.memory_space<vmem>>, vector<16x1xf32>
      tpu.vector_store %arg9[%c0_87, %c0_88], %123 {strides = array<i32>} : memref<16x1xf32, #tpu.memory_space<vmem>>, vector<16x1xf32>,
    } else {
    }
    return
  }
  func.func @transform_0(%arg0: i32) -> (i32, i32) {
    %c0_i32 = arith.constant 0 : i32
    %c0_i32_0 = arith.constant 0 : i32
    return %arg0, %c0_i32 : i32, i32
  }
  func.func @transform_1(%arg0: i32) -> (i32, i32) {
    %c0_i32 = arith.constant 0 : i32
    %c0_i32_0 = arith.constant 0 : i32
    %c0_i32_1 = arith.constant 0 : i32
    return %c0_i32, %c0_i32_0 : i32, i32
  }
  func.func @transform_2(%arg0: i32) -> (i32, i32) {
    %c0_i32 = arith.constant 0 : i32
    %c0_i32_0 = arith.constant 0 : i32
    %c0_i32_1 = arith.constant 0 : i32
    return %c0_i32, %c0_i32_0 : i32, i32
  }
  func.func @transform_3(%arg0: i32) -> (i32, i32) {
    %c0_i32 = arith.constant 0 : i32
    %c0_i32_0 = arith.constant 0 : i32
    %c0_i32_1 = arith.constant 0 : i32
    return %c0_i32, %c0_i32_0 : i32, i32
  }
  func.func @transform_4(%arg0: i32) -> (i32, i32) {
    %c0_i32 = arith.constant 0 : i32
    %c0_i32_0 = arith.constant 0 : i32
    %c0_i32_1 = arith.constant 0 : i32
    return %c0_i32, %c0_i32_0 : i32, i32
  }
  func.func @transform_5(%arg0: i32) -> (i32, i32) {
    %c0_i32 = arith.constant 0 : i32
    %c0_i32_0 = arith.constant 0 : i32
    %c0_i32_1 = arith.constant 0 : i32
    return %c0_i32, %c0_i32_0 : i32, i32
  }
  func.func @transform_6(%arg0: i32) -> (i32, i32) {
    %c0_i32 = arith.constant 0 : i32
    %c0_i32_0 = arith.constant 0 : i32
    %c0_i32_1 = arith.constant 0 : i32
    return %c0_i32, %c0_i32_0 : i32, i32
  }
  func.func @transform_7(%arg0: i32) -> (i32, i32) {
    %c0_i32 = arith.constant 0 : i32
    %c0_i32_0 = arith.constant 0 : i32
    %c0_i32_1 = arith.constant 0 : i32
    return %c0_i32, %c0_i32_0 : i32, i32
  }
  func.func @transform_8(%arg0: i32) -> (i32, i32) {
    %c0_i32 = arith.constant 0 : i32
    %c0_i32_0 = arith.constant 0 : i32
    %c0_i32_1 = arith.constant 0 : i32
    return %c0_i32, %c0_i32_0 : i32, i32
  }
}

</mosaic_0001>

<llo_original>
// kernel: tpu_custom_call.1
$region0: #{tpu_custom_call.1}
  #allocation0 [shape = 'u32[]', space=smem, size = 0x4, offset = 0x4, fixed_abs, tag = 'smem constant byte address 0x4 - core index']
  #allocation1 [shape = 'u32[144,128]{1,0:T(1,128)}', space=vmem, size = 0x12000, scoped, tag = 'internal scratch']
  #allocation2 [shape = 'f32[2,16,128]{2,1,0:T(8,128)}', space=vmem, size = 0x4000, scoped, tag = 'scratch operand']
  #allocation3 [shape = 'f32[64,128]{1,0:T(8,128)}', space=vmem, size = 0x8000, scoped, tag = 'scratch operand']
  #allocation4 [shape = 'f32[1,1]{1,0:T(1,128)S(1)}', space=vmem, size = 0x200, scoped, tag = 'scoped memory for tpu_custom_call.1']
  %s0 = inlined_call_operand.hbm [shape: bf16[128,128], index: 0, kind: input, shape index: {}]
  %s1 = inlined_call_operand.hbm [shape: bf16[128,128], index: 1, kind: input, shape index: {}]
  %s2 = inlined_call_operand.vmem [shape: f32[1,128], index: 2, kind: input, shape index: {}]
  %s3 = inlined_call_operand.hbm [shape: bf16[128,128], index: 3, kind: input, shape index: {}]
  %s4 = inlined_call_operand.hbm [shape: bf16[256,128], index: 4, kind: input, shape index: {}]
  %s5 = inlined_call_operand.vmem [shape: f32[1,128], index: 5, kind: input, shape index: {}]
  %s6 = inlined_call_operand.vmem [shape: f32[1,128], index: 6, kind: input, shape index: {}]
  %s7 = inlined_call_operand.<no memory space> [shape: f32[1,1], index: 7, kind: input, shape index: {}]
  %s8 = inlined_call_operand.vmem [shape: f32[16,1], index: 8, kind: output, shape index: {}]
  %s9 = sld [smem:[#allocation0]]
  $region89: #{tpu_custom_call.1} parent=0
    _
  %s11 = ssub.s32 1, %s9
  %s12 = scalar_select 0, %s11, %s9
  %v13 = vstv %s7
  %14 = vst [vmem:[#allocation4] sm:$0x1] %v13
  $region1: #{tpu_custom_call.1} parent=0
    #allocation5 [shape = 'u8[32768]{0}', space=vmem, size = 0x8000, scoped, tag = 'input window, operand 0']
    #allocation6 [shape = 's32[2]{0}', space=sflag, size = 0x8, scoped, tag = 'scoped memory for tpu_custom_call.1']
    #allocation7 [shape = 'u8[32768]{0}', space=vmem, size = 0x8000, scoped, tag = 'input window, operand 1, single buffered']
    #allocation8 [shape = 's32[1]{0}', space=sflag, size = 0x4, scoped, tag = 'scoped memory for tpu_custom_call.1']
    #allocation9 [shape = 'u8[32768]{0}', space=vmem, size = 0x8000, scoped, tag = 'input window, operand 3, single buffered']
    #allocation10 [shape = 'u8[65536]{0}', space=vmem, size = 0x10000, scoped, tag = 'input window, operand 4, single buffered']
    #allocation11 [shape = 's32[1]{0}', space=sflag, size = 0x4, scoped, tag = 'scoped memory for tpu_custom_call.1']
    %15 = vsyncpa [#allocation6], 0
    %s16 = scalar_lea.sflag [#allocation6], 1
    %17 = vsyncpa %s16, 0
    %18 = vsyncpa [#allocation8], 0
    %19 = vsyncpa [#allocation11], 0
    loop: start=0, step=1, limit=4
    $region2: #{tpu_custom_call.1} parent=1 // loop_pre_header
      _
    $region3: #{tpu_custom_call.1} parent=1 // loop_header
      %s21 = sphi 0, %s25
      %p22 = scmp.ge.s32.totalorder %s21, 4
      %s31 = sphi 0, %s33
      %s34 = sphi 0, %s31
      %s35 = sphi 0, %s34
      %s51 = sphi 0, %s35
      %s55 = sphi 0, %s55
      %s57 = sphi 0, %s55
      %s58 = sphi 0, %s57
      %s72 = sphi 0, %s58
      %s76 = sphi 0, %s76
      %s78 = sphi 0, %s76
      %s79 = sphi 0, %s78
      %s93 = sphi 0, %s79
      %s97 = sphi 0, %s97
      %s99 = sphi 0, %s97
      %s100 = sphi 0, %s99
      %s114 = sphi 0, %s100
      %s118 = sphi 0, %s118
      %s120 = sphi 0, %s118
      %s121 = sphi 0, %s120
      %s135 = sphi 0, %s121
      %s139 = sphi 0, %s139
      %s141 = sphi 0, %s139
      %s142 = sphi 0, %s141
      %s156 = sphi 0, %s142
      %s160 = sphi 0, %s160
      %s162 = sphi 0, %s160
      %s163 = sphi 0, %s162
      %s177 = sphi 0, %s163
      %s181 = sphi 0, %s181
      %s183 = sphi 0, %s181
      %s184 = sphi 0, %s183
      %s198 = sphi 0, %s184
      %s202 = sphi 0, %s202
      %s204 = sphi 0, %s202
      %s205 = sphi 0, %s204
      %s219 = sphi 0, %s205
    $region4: #{tpu_custom_call.1} parent=1 // loop_header_branch
      %24 = sbr.rel (%p22) target = $region8
    $region5: #{tpu_custom_call.1} parent=1 // loop_body
      %s26 = ssub.s32 %s21, 1
      %s27 = ssub.s32 %s21, 2
      %s28 = sadd.s32 %s21, 1
      %s29 = ssub.s32 %s21, %s28
      %p30 = scmp.eq.s32.totalorder %s29, 0
      %s32 = sadd.s32 %s31, 1
      %s33 = scalar_select %p30, %s31, %s32
      %p36 = pneg %p30
      %p37 = scmp.eq.s32.totalorder %s21, 1
      %p38 = por %p36, %p37
      %p39 = scmp.ne.s32.totalorder %s31, %s34
      %p40 = scmp.eq.s32.totalorder %s21, 0
      %p41 = por %p39, %p40
      %p42 = scmp.ne.s32.totalorder %s31, %s34
      %p43 = scmp.eq.s32.totalorder %s26, 1
      %p44 = por %p42, %p43
      %p45 = scmp.ne.s32.totalorder %s34, %s35
      %p46 = scmp.eq.s32.totalorder %s26, 0
      %p47 = por %p45, %p46
      %p48 = scmp.ne.s32.totalorder %s34, %s35
      %p49 = scmp.eq.s32.totalorder %s27, 1
      %p50 = por %p48, %p49
      %p52 = scmp.ne.s32.totalorder %s35, %s51
      %p53 = scmp.eq.s32.totalorder %s27, 0
      %p54 = por %p52, %p53
      %s56 = sadd.s32 %s55, 1
      %p59 = scmp.eq.s32.totalorder %s21, 1
      %p60 = scmp.ne.s32.totalorder %s55, %s57
      %p61 = scmp.eq.s32.totalorder %s21, 0
      %p62 = por %p60, %p61
      %p63 = scmp.ne.s32.totalorder %s55, %s57
      %p64 = scmp.eq.s32.totalorder %s26, 1
      %p65 = por %p63, %p64
      %p66 = scmp.ne.s32.totalorder %s57, %s58
      %p67 = scmp.eq.s32.totalorder %s26, 0
      %p68 = por %p66, %p67
      %p69 = scmp.ne.s32.totalorder %s57, %s58
      %p70 = scmp.eq.s32.totalorder %s27, 1
      %p71 = por %p69, %p70
      %p73 = scmp.ne.s32.totalorder %s58, %s72
      %p74 = scmp.eq.s32.totalorder %s27, 0
      %p75 = por %p73, %p74
      %s77 = sadd.s32 %s76, 1
      %p80 = scmp.eq.s32.totalorder %s21, 1
      %p81 = scmp.ne.s32.totalorder %s76, %s78
      %p82 = scmp.eq.s32.totalorder %s21, 0
      %p83 = por %p81, %p82
      %p84 = scmp.ne.s32.totalorder %s76, %s78
      %p85 = scmp.eq.s32.totalorder %s26, 1
      %p86 = por %p84, %p85
      %p87 = scmp.ne.s32.totalorder %s78, %s79
      %p88 = scmp.eq.s32.totalorder %s26, 0
      %p89 = por %p87, %p88
      %p90 = scmp.ne.s32.totalorder %s78, %s79
      %p91 = scmp.eq.s32.totalorder %s27, 1
      %p92 = por %p90, %p91
      %p94 = scmp.ne.s32.totalorder %s79, %s93
      %p95 = scmp.eq.s32.totalorder %s27, 0
      %p96 = por %p94, %p95
      %s98 = sadd.s32 %s97, 1
      %p101 = scmp.eq.s32.totalorder %s21, 1
      %p102 = scmp.ne.s32.totalorder %s97, %s99
      %p103 = scmp.eq.s32.totalorder %s21, 0
      %p104 = por %p102, %p103
      %p105 = scmp.ne.s32.totalorder %s97, %s99
      %p106 = scmp.eq.s32.totalorder %s26, 1
      %p107 = por %p105, %p106
      %p108 = scmp.ne.s32.totalorder %s99, %s100
      %p109 = scmp.eq.s32.totalorder %s26, 0
      %p110 = por %p108, %p109
      %p111 = scmp.ne.s32.totalorder %s99, %s100
      %p112 = scmp.eq.s32.totalorder %s27, 1
      %p113 = por %p111, %p112
      %p115 = scmp.ne.s32.totalorder %s100, %s114
      %p116 = scmp.eq.s32.totalorder %s27, 0
      %p117 = por %p115, %p116
      %s119 = sadd.s32 %s118, 1
      %p122 = scmp.eq.s32.totalorder %s21, 1
      %p123 = scmp.ne.s32.totalorder %s118, %s120
      %p124 = scmp.eq.s32.totalorder %s21, 0
      %p125 = por %p123, %p124
      %p126 = scmp.ne.s32.totalorder %s118, %s120
      %p127 = scmp.eq.s32.totalorder %s26, 1
      %p128 = por %p126, %p127
      %p129 = scmp.ne.s32.totalorder %s120, %s121
      %p130 = scmp.eq.s32.totalorder %s26, 0
      %p131 = por %p129, %p130
      %p132 = scmp.ne.s32.totalorder %s120, %s121
      %p133 = scmp.eq.s32.totalorder %s27, 1
      %p134 = por %p132, %p133
      %p136 = scmp.ne.s32.totalorder %s121, %s135
      %p137 = scmp.eq.s32.totalorder %s27, 0
      %p138 = por %p136, %p137
      %s140 = sadd.s32 %s139, 1
      %p143 = scmp.eq.s32.totalorder %s21, 1
      %p144 = scmp.ne.s32.totalorder %s139, %s141
      %p145 = scmp.eq.s32.totalorder %s21, 0
      %p146 = por %p144, %p145
      %p147 = scmp.ne.s32.totalorder %s139, %s141
      %p148 = scmp.eq.s32.totalorder %s26, 1
      %p149 = por %p147, %p148
      %p150 = scmp.ne.s32.totalorder %s141, %s142
      %p151 = scmp.eq.s32.totalorder %s26, 0
      %p152 = por %p150, %p151
      %p153 = scmp.ne.s32.totalorder %s141, %s142
      %p154 = scmp.eq.s32.totalorder %s27, 1
      %p155 = por %p153, %p154
      %p157 = scmp.ne.s32.totalorder %s142, %s156
      %p158 = scmp.eq.s32.totalorder %s27, 0
      %p159 = por %p157, %p158
      %s161 = sadd.s32 %s160, 1
      %p164 = scmp.eq.s32.totalorder %s21, 1
      %p165 = scmp.ne.s32.totalorder %s160, %s162
      %p166 = scmp.eq.s32.totalorder %s21, 0
      %p167 = por %p165, %p166
      %p168 = scmp.ne.s32.totalorder %s160, %s162
      %p169 = scmp.eq.s32.totalorder %s26, 1
      %p170 = por %p168, %p169
      %p171 = scmp.ne.s32.totalorder %s162, %s163
      %p172 = scmp.eq.s32.totalorder %s26, 0
      %p173 = por %p171, %p172
      %p174 = scmp.ne.s32.totalorder %s162, %s163
      %p175 = scmp.eq.s32.totalorder %s27, 1
      %p176 = por %p174, %p175
      %p178 = scmp.ne.s32.totalorder %s163, %s177
      %p179 = scmp.eq.s32.totalorder %s27, 0
      %p180 = por %p178, %p179
      %s182 = sadd.s32 %s181, 1
      %p185 = scmp.eq.s32.totalorder %s21, 1
      %p186 = scmp.ne.s32.totalorder %s181, %s183
      %p187 = scmp.eq.s32.totalorder %s21, 0
      %p188 = por %p186, %p187
      %p189 = scmp.ne.s32.totalorder %s181, %s183
      %p190 = scmp.eq.s32.totalorder %s26, 1
      %p191 = por %p189, %p190
      %p192 = scmp.ne.s32.totalorder %s183, %s184
      %p193 = scmp.eq.s32.totalorder %s26, 0
      %p194 = por %p192, %p193
      %p195 = scmp.ne.s32.totalorder %s183, %s184
      %p196 = scmp.eq.s32.totalorder %s27, 1
      %p197 = por %p195, %p196
      %p199 = scmp.ne.s32.totalorder %s184, %s198
      %p200 = scmp.eq.s32.totalorder %s27, 0
      %p201 = por %p199, %p200
      %s203 = sadd.s32 %s202, 1
      %p206 = scmp.eq.s32.totalorder %s21, 1
      %p207 = scmp.ne.s32.totalorder %s202, %s204
      %p208 = scmp.eq.s32.totalorder %s21, 0
      %p209 = por %p207, %p208
      %p210 = scmp.ne.s32.totalorder %s202, %s204
      %p211 = scmp.eq.s32.totalorder %s26, 1
      %p212 = por %p210, %p211
      %p213 = scmp.ne.s32.totalorder %s204, %s205
      %p214 = scmp.eq.s32.totalorder %s26, 0
      %p215 = por %p213, %p214
      %p216 = scmp.ne.s32.totalorder %s204, %s205
      %p217 = scmp.eq.s32.totalorder %s27, 1
      %p218 = por %p216, %p217
      %p220 = scmp.ne.s32.totalorder %s205, %s219
      %p221 = scmp.eq.s32.totalorder %s27, 0
      %p222 = por %p220, %p221
      %p223 = scmp.le.s32.totalorder 1, %s21
      %p224 = scmp.lt.s32.totalorder %s21, 3
      %p225 = pnand %p223, %p224
      %p226 = pneg %p225
      // Predicated region
      $region9: #{tpu_custom_call.1} parent=5 // pred_check
        _
      $region10: #{tpu_custom_call.1} parent=5 // pred_check_branch
        %228 = sbr.rel (%p225) target = $region12
      $region11: #{tpu_custom_call.1} parent=5 // pred_region
        %s229 = ssub.s32 %s21, 1
        // Predicated region
        $region13: #{tpu_custom_call.1} parent=11 // pred_check
          %p230 = pneg %p68
        $region14: #{tpu_custom_call.1} parent=11 // pred_check_branch
          %232 = sbr.rel (%p230) target = $region16
        $region15: #{tpu_custom_call.1} parent=11 // pred_region
          %s234 = ssub.s32 1024, 1024
          %235 = vsyncadd [#allocation8], %s234
          %s236 = sshll.u32 [#allocation7], 4
          %s237 = int_to_ptr.vmem [resolvable:$true] %s236
          %242 = dma.hbm_to_vmem [thread:$0]  %s1, 1024, %s237, [#allocation8], 64, 64, 4
        $region16: #{tpu_custom_call.1} parent=11 // pred_fallthru
          _
        // Predicated region
        $region17: #{tpu_custom_call.1} parent=11 // pred_check
          %p243 = pneg %p89
        $region18: #{tpu_custom_call.1} parent=11 // pred_check_branch
          %245 = sbr.rel (%p243) target = $region20
        $region19: #{tpu_custom_call.1} parent=11 // pred_region
          _
        $region20: #{tpu_custom_call.1} parent=11 // pred_fallthru
          _
        // Predicated region
        $region21: #{tpu_custom_call.1} parent=11 // pred_check
          %p246 = pneg %p110
        $region22: #{tpu_custom_call.1} parent=11 // pred_check_branch
          %248 = sbr.rel (%p246) target = $region24
        $region23: #{tpu_custom_call.1} parent=11 // pred_region
          %s250 = ssub.s32 1024, 1024
          %251 = vsyncadd [#allocation8], %s250
          %s252 = sshll.u32 [#allocation9], 4
          %s253 = int_to_ptr.vmem [resolvable:$true] %s252
          %258 = dma.hbm_to_vmem [thread:$0]  %s3, 1024, %s253, [#allocation8], 64, 64, 4
        $region24: #{tpu_custom_call.1} parent=11 // pred_fallthru
          _
        // Predicated region
        $region25: #{tpu_custom_call.1} parent=11 // pred_check
          %p259 = pneg %p131
        $region26: #{tpu_custom_call.1} parent=11 // pred_check_branch
          %261 = sbr.rel (%p259) target = $region28
        $region27: #{tpu_custom_call.1} parent=11 // pred_region
          %s263 = ssub.s32 2048, 2048
          %264 = vsyncadd [#allocation11], %s263
          %s265 = sshll.u32 [#allocation10], 4
          %s266 = int_to_ptr.vmem [resolvable:$true] %s265
          %271 = dma.hbm_to_vmem [thread:$0]  %s4, 2048, %s266, [#allocation11], 64, 64, 4
        $region28: #{tpu_custom_call.1} parent=11 // pred_fallthru
          _
        // Predicated region
        $region29: #{tpu_custom_call.1} parent=11 // pred_check
          %p272 = pneg %p152
        $region30: #{tpu_custom_call.1} parent=11 // pred_check_branch
          %274 = sbr.rel (%p272) target = $region32
        $region31: #{tpu_custom_call.1} parent=11 // pred_region
          _
        $region32: #{tpu_custom_call.1} parent=11 // pred_fallthru
          _
        // Predicated region
        $region33: #{tpu_custom_call.1} parent=11 // pred_check
          %p275 = pneg %p173
        $region34: #{tpu_custom_call.1} parent=11 // pred_check_branch
          %277 = sbr.rel (%p275) target = $region36
        $region35: #{tpu_custom_call.1} parent=11 // pred_region
          _
        $region36: #{tpu_custom_call.1} parent=11 // pred_fallthru
          _
        // Predicated region
        $region37: #{tpu_custom_call.1} parent=11 // pred_check
          %p278 = pneg %p194
        $region38: #{tpu_custom_call.1} parent=11 // pred_check_branch
          %280 = sbr.rel (%p278) target = $region40
        $region39: #{tpu_custom_call.1} parent=11 // pred_region
          _
        $region40: #{tpu_custom_call.1} parent=11 // pred_fallthru
          _
      $region12: #{tpu_custom_call.1} parent=5 // pred_fallthru
        _
      %p281 = scmp.lt.s32.totalorder %s21, 2
      // Predicated region
      $region41: #{tpu_custom_call.1} parent=5 // pred_check
        %p282 = pneg %p281
      $region42: #{tpu_custom_call.1} parent=5 // pred_check_branch
        %284 = sbr.rel (%p282) target = $region44
      $region43: #{tpu_custom_call.1} parent=5 // pred_region
        // Predicated region
        $region45: #{tpu_custom_call.1} parent=43 // pred_check
          %p285 = pneg %p41
        $region46: #{tpu_custom_call.1} parent=43 // pred_check_branch
          %287 = sbr.rel (%p285) target = $region48
        $region47: #{tpu_custom_call.1} parent=43 // pred_region
          %s288 = sand.u32 %s31, 1
          %s289 = scalar_lea.sflag [#allocation6], %s288
          %s290 = sand.u32 %s31, 1
          %s291 = smul.addr %s290, 32
          %s292 = scalar_lea.vmem [#allocation5], %s291
          %s293 = smul.u32 8, %s21
          %s295 = ssub.s32 512, 512
          %296 = vsyncadd %s289, %s295
          %s297 = smul.addr %s293, 64
          %s298 = scalar_lea.hbm %s0, %s297
          %s299 = sshll.u32 %s292, 4
          %s300 = int_to_ptr.vmem [resolvable:$true] %s299
          %305 = dma.hbm_to_vmem [thread:$0]  %s298, 512, %s300, %s289, 64, 64, 4
        $region48: #{tpu_custom_call.1} parent=43 // pred_fallthru
          _
      $region44: #{tpu_custom_call.1} parent=5 // pred_fallthru
        _
      %p306 = scmp.le.s32.totalorder 1, %s21
      %p307 = scmp.lt.s32.totalorder %s21, 3
      %p308 = pnand %p306, %p307
      %p309 = pneg %p308
      // Predicated region
      $region49: #{tpu_custom_call.1} parent=5 // pred_check
        _
      $region50: #{tpu_custom_call.1} parent=5 // pred_check_branch
        %311 = sbr.rel (%p308) target = $region52
      $region51: #{tpu_custom_call.1} parent=5 // pred_region
        %s312 = ssub.s32 %s21, 1
        %s313 = sand.u32 %s34, 1
        %s314 = scalar_lea.sflag [#allocation6], %s313
        %s315 = sand.u32 %s34, 1
        %s316 = smul.addr %s315, 32
        %s317 = scalar_lea.vmem [#allocation5], %s316
        // Predicated region
        $region53: #{tpu_custom_call.1} parent=51 // pred_check
          %p318 = pneg %p47
        $region54: #{tpu_custom_call.1} parent=51 // pred_check_branch
          %320 = sbr.rel (%p318) target = $region56
        $region55: #{tpu_custom_call.1} parent=51 // pred_region
          %321 = dma.done %s314, 512
        $region56: #{tpu_custom_call.1} parent=51 // pred_fallthru
          _
        // Predicated region
        $region57: #{tpu_custom_call.1} parent=51 // pred_check
          %p322 = pneg %p68
        $region58: #{tpu_custom_call.1} parent=51 // pred_check_branch
          %324 = sbr.rel (%p322) target = $region60
        $region59: #{tpu_custom_call.1} parent=51 // pred_region
          %325 = dma.done [#allocation8], 1024
        $region60: #{tpu_custom_call.1} parent=51 // pred_fallthru
          _
        // Predicated region
        $region61: #{tpu_custom_call.1} parent=51 // pred_check
          %p326 = pneg %p110
        $region62: #{tpu_custom_call.1} parent=51 // pred_check_branch
          %328 = sbr.rel (%p326) target = $region64
        $region63: #{tpu_custom_call.1} parent=51 // pred_region
          %329 = dma.done [#allocation8], 1024
        $region64: #{tpu_custom_call.1} parent=51 // pred_fallthru
          _
        // Predicated region
        $region65: #{tpu_custom_call.1} parent=51 // pred_check
          %p330 = pneg %p131
        $region66: #{tpu_custom_call.1} parent=51 // pred_check_branch
          %332 = sbr.rel (%p330) target = $region68
        $region67: #{tpu_custom_call.1} parent=51 // pred_region
          %333 = dma.done [#allocation11], 2048
        $region68: #{tpu_custom_call.1} parent=51 // pred_fallthru
          _
        %s334 = sand.u32 %s34, 1
        %s335 = scalar_lea.sflag [#allocation6], %s334
        %s336 = sand.u32 %s34, 1
        %s337 = smul.addr %s336, 32
        %s338 = scalar_lea.vmem [#allocation5], %s337
        %p339 = pneg %p47
        %p340 = pneg %p44
        %p341 = pneg %p68
        %p342 = pneg %p65
        %p343 = pneg %p89
        %p344 = pneg %p86
        %p345 = pneg %p110
        %p346 = pneg %p107
        %p347 = pneg %p131
        %p348 = pneg %p128
        %p349 = pneg %p152
        %p350 = pneg %p149
        %p351 = pneg %p173
        %p352 = pneg %p170
        %p353 = pneg %p194
        %p354 = pneg %p191
        %p355 = pneg %p215
        %p356 = pneg %p212
        %s357 = smul.u32 8, %s26
        %p359 = scmp.eq.s32.totalorder %s26, 0
        // Predicated region
        $region69: #{tpu_custom_call.1} parent=51 // pred_check
          %p360 = pneg %p359
        $region70: #{tpu_custom_call.1} parent=51 // pred_check_branch
          %362 = sbr.rel (%p360) target = $region72
        $region71: #{tpu_custom_call.1} parent=51 // pred_region
          %363 = vst [vmem:[#allocation2] sm:$0xff] 0.0
          %364 = vst [vmem:[#allocation2 + $0x8] sm:$0xff] 0.0
          %365 = vst [vmem:[#allocation2 + $0x10] sm:$0xff] 0.0
          %366 = vst [vmem:[#allocation2 + $0x18] sm:$0xff] 0.0
        $region72: #{tpu_custom_call.1} parent=51 // pred_fallthru
          _
        %v367 = vld [vmem:[%s317] sm:$0xf]
        %v368 = vld [vmem:[%s317 + $0x4] sm:$0xf]
        %v369 = vld [vmem:[%s317 + $0x8] sm:$0xf]
        %v370 = vld [vmem:[%s317 + $0xc] sm:$0xf]
        %v371 = vld [vmem:[%s317 + $0x10] sm:$0xf]
        %v372 = vld [vmem:[%s317 + $0x14] sm:$0xf]
        %v373 = vld [vmem:[%s317 + $0x18] sm:$0xf]
        %v374 = vld [vmem:[%s317 + $0x1c] sm:$0xf]
        %v375 = vld [vmem:[#allocation7] sm:$0xf]
        %v376 = vld [vmem:[#allocation7 + $0x4] sm:$0xf]
        %v377 = vld [vmem:[#allocation7 + $0x8] sm:$0xf]
        %v378 = vld [vmem:[#allocation7 + $0xc] sm:$0xf]
        %v379 = vld [vmem:[#allocation7 + $0x10] sm:$0xf]
        %v380 = vld [vmem:[#allocation7 + $0x14] sm:$0xf]
        %v381 = vld [vmem:[#allocation7 + $0x18] sm:$0xf]
        %v382 = vld [vmem:[#allocation7 + $0x1c] sm:$0xf]
        %v383 = vld [vmem:[#allocation7 + $0x20] sm:$0xf]
        %v384 = vld [vmem:[#allocation7 + $0x24] sm:$0xf]
        %v385 = vld [vmem:[#allocation7 + $0x28] sm:$0xf]
        %v386 = vld [vmem:[#allocation7 + $0x2c] sm:$0xf]
        %v387 = vld [vmem:[#allocation7 + $0x30] sm:$0xf]
        %v388 = vld [vmem:[#allocation7 + $0x34] sm:$0xf]
        %v389 = vld [vmem:[#allocation7 + $0x38] sm:$0xf]
        %v390 = vld [vmem:[#allocation7 + $0x3c] sm:$0xf]
        %v391 = vld [vmem:[%s2] sm:$0x1]
        %v393 = vlaneseq
        %v394 = vshrl.u32 %v393, 7
        %v395 = vsub.s32 0, %v394
        %v396 = vrot.slane %v391, %v395
        %v406 = vunpack.c.l.b16 %v367
        %v407 = vunpack.c.l.b16 %v368
        %v408 = vunpack.c.l.b16 %v369
        %v409 = vunpack.c.l.b16 %v370
        %v410 = vunpack.c.l.b16 %v371
        %v411 = vunpack.c.l.b16 %v372
        %v412 = vunpack.c.l.b16 %v373
        %v413 = vunpack.c.l.b16 %v374
        %v414 = vpack.c.b16 %v407, %v406
        %v415 = vpack.c.b16 %v409, %v408
        %v416 = vpack.c.b16 %v411, %v410
        %v417 = vpack.c.b16 %v413, %v412
        %v438 = vunpack.c.l.b16 %v375
        %v439 = vunpack.c.l.b16 %v376
        %v440 = vunpack.c.l.b16 %v377
        %v441 = vunpack.c.l.b16 %v378
        %v442 = vunpack.c.l.b16 %v379
        %v443 = vunpack.c.l.b16 %v380
        %v444 = vunpack.c.l.b16 %v381
        %v445 = vunpack.c.l.b16 %v382
        %v446 = vunpack.c.l.b16 %v383
        %v447 = vunpack.c.l.b16 %v384
        %v448 = vunpack.c.l.b16 %v385
        %v449 = vunpack.c.l.b16 %v386
        %v450 = vunpack.c.l.b16 %v387
        %v451 = vunpack.c.l.b16 %v388
        %v452 = vunpack.c.l.b16 %v389
        %v453 = vunpack.c.l.b16 %v390
        %v454 = vpack.c.b16 %v439, %v438
        %v455 = vpack.c.b16 %v441, %v440
        %v456 = vpack.c.b16 %v443, %v442
        %v457 = vpack.c.b16 %v445, %v444
        %v458 = vpack.c.b16 %v447, %v446
        %v459 = vpack.c.b16 %v449, %v448
        %v460 = vpack.c.b16 %v451, %v450
        %v461 = vpack.c.b16 %v453, %v452
        %470 = vmatprep.subr.bf16.mxu0 0
        %471 = vmatpush1.bf16.msra.mxu0 %v454
        %472 = vmatprep.subr.bf16.mxu0 0
        %473 = vmatpush1.bf16.msra.mxu0 %v455
        %474 = vmatprep.subr.bf16.mxu0 0
        %475 = vmatpush1.bf16.msra.mxu0 %v456
        %476 = vmatprep.subr.bf16.mxu0 0
        %477 = vmatpush1.bf16.msra.mxu0 %v457
        %478 = vmatprep.subr.bf16.mxu0 0
        %479 = vmatpush1.bf16.msra.mxu0 %v458
        %480 = vmatprep.subr.bf16.mxu0 0
        %481 = vmatpush1.bf16.msra.mxu0 %v459
        %482 = vmatprep.subr.bf16.mxu0 0
        %483 = vmatpush1.bf16.msra.mxu0 %v460
        %484 = vmatprep.subr.bf16.mxu0 0
        %485 = vmatpush1.bf16.msra.mxu0 %v461
        %486 = vmatprep.subr.bf16.mxu0 0
        %487 = vmatpush1.bf16.msra.mxu0 0
        %488 = vmatprep.subr.bf16.mxu0 0
        %489 = vmatpush1.bf16.msra.mxu0 0
        %490 = vmatprep.subr.bf16.mxu0 0
        %491 = vmatpush1.bf16.msra.mxu0 0
        %492 = vmatprep.subr.bf16.mxu0 0
        %493 = vmatpush1.bf16.msra.mxu0 0
        %494 = vmatprep.subr.bf16.mxu0 0
        %495 = vmatpush1.bf16.msra.mxu0 0
        %496 = vmatprep.subr.bf16.mxu0 0
        %497 = vmatpush1.bf16.msra.mxu0 0
        %498 = vmatprep.subr.bf16.mxu0 0
        %499 = vmatpush1.bf16.msra.mxu0 0
        %500 = vmatprep.subr.bf16.mxu0 0
        %501 = vmatpush1.bf16.msra.mxu0 0
        %502 = vmatprep.mubr.bf16.mxu0 0
        %503 = vmatmul.mubr.bf16.gmra.mrb[0].mxu0 %v414
        %v504 = vpop.f32.mrb[0].mxu0
        %v505 = vadd.f32 %v396, %v504
        %v506 = vpop.f32.mrb[0].mxu0
        %v507 = vpop.f32.mrb[0].mxu0
        %v508 = vadd.f32 %v396, %v507
        %v509 = vpop.f32.mrb[0].mxu0
        %510 = vmatprep.mubr.bf16.mxu0 0
        %511 = vmatmul.mubr.bf16.gmra.mrb[0].mxu0 %v415
        %v512 = vpop.f32.mrb[0].mxu0
        %v513 = vadd.f32 %v396, %v512
        %v514 = vpop.f32.mrb[0].mxu0
        %v515 = vpop.f32.mrb[0].mxu0
        %v516 = vadd.f32 %v396, %v515
        %v517 = vpop.f32.mrb[0].mxu0
        %518 = vmatprep.mubr.bf16.mxu0 0
        %519 = vmatmul.mubr.bf16.gmra.mrb[0].mxu0 %v416
        %v520 = vpop.f32.mrb[0].mxu0
        %v521 = vadd.f32 %v396, %v520
        %v522 = vpop.f32.mrb[0].mxu0
        %v523 = vpop.f32.mrb[0].mxu0
        %v524 = vadd.f32 %v396, %v523
        %v525 = vpop.f32.mrb[0].mxu0
        %526 = vmatprep.mubr.bf16.mxu0 0
        %527 = vmatmul.mubr.bf16.gmra.mrb[0].mxu0 %v417
        %v528 = vpop.f32.mrb[0].mxu0
        %v529 = vadd.f32 %v396, %v528
        %v530 = vpop.f32.mrb[0].mxu0
        %v531 = vpop.f32.mrb[0].mxu0
        %v532 = vadd.f32 %v396, %v531
        %v533 = vpop.f32.mrb[0].mxu0
        %534 = vdwg.mxu0
        %535 = vst [vmem:[#allocation3] sm:$0xff] %v505
        %536 = vst [vmem:[#allocation3 + $0x8] sm:$0xff] %v508
        %537 = vst [vmem:[#allocation3 + $0x10] sm:$0xff] %v513
        %538 = vst [vmem:[#allocation3 + $0x18] sm:$0xff] %v516
        %539 = vst [vmem:[#allocation3 + $0x20] sm:$0xff] %v521
        %540 = vst [vmem:[#allocation3 + $0x28] sm:$0xff] %v524
        %541 = vst [vmem:[#allocation3 + $0x30] sm:$0xff] %v529
        %542 = vst [vmem:[#allocation3 + $0x38] sm:$0xff] %v532
        %v543 = vld [vmem:[#allocation9] sm:$0xf]
        %v544 = vld [vmem:[#allocation9 + $0x4] sm:$0xf]
        %v545 = vld [vmem:[#allocation9 + $0x8] sm:$0xf]
        %v546 = vld [vmem:[#allocation9 + $0xc] sm:$0xf]
        %v547 = vld [vmem:[#allocation9 + $0x10] sm:$0xf]
        %v548 = vld [vmem:[#allocation9 + $0x14] sm:$0xf]
        %v549 = vld [vmem:[#allocation9 + $0x18] sm:$0xf]
        %v550 = vld [vmem:[#allocation9 + $0x1c] sm:$0xf]
        %v551 = vld [vmem:[#allocation9 + $0x20] sm:$0xf]
        %v552 = vld [vmem:[#allocation9 + $0x24] sm:$0xf]
        %v553 = vld [vmem:[#allocation9 + $0x28] sm:$0xf]
        %v554 = vld [vmem:[#allocation9 + $0x2c] sm:$0xf]
        %v555 = vld [vmem:[#allocation9 + $0x30] sm:$0xf]
        %v556 = vld [vmem:[#allocation9 + $0x34] sm:$0xf]
        %v557 = vld [vmem:[#allocation9 + $0x38] sm:$0xf]
        %v558 = vld [vmem:[#allocation9 + $0x3c] sm:$0xf]
        %v559 = vld [vmem:[#allocation10] sm:$0xf]
        %v560 = vld [vmem:[#allocation10 + $0x4] sm:$0xf]
        %v561 = vld [vmem:[#allocation10 + $0x8] sm:$0xf]
        %v562 = vld [vmem:[#allocation10 + $0xc] sm:$0xf]
        %v563 = vld [vmem:[#allocation10 + $0x10] sm:$0xf]
        %v564 = vld [vmem:[#allocation10 + $0x14] sm:$0xf]
        %v565 = vld [vmem:[#allocation10 + $0x18] sm:$0xf]
        %v566 = vld [vmem:[#allocation10 + $0x1c] sm:$0xf]
        %v567 = vld [vmem:[#allocation10 + $0x20] sm:$0xf]
        %v568 = vld [vmem:[#allocation10 + $0x24] sm:$0xf]
        %v569 = vld [vmem:[#allocation10 + $0x28] sm:$0xf]
        %v570 = vld [vmem:[#allocation10 + $0x2c] sm:$0xf]
        %v571 = vld [vmem:[#allocation10 + $0x30] sm:$0xf]
        %v572 = vld [vmem:[#allocation10 + $0x34] sm:$0xf]
        %v573 = vld [vmem:[#allocation10 + $0x38] sm:$0xf]
        %v574 = vld [vmem:[#allocation10 + $0x3c] sm:$0xf]
        %v575 = vld [vmem:[#allocation10 + $0x40] sm:$0xf]
        %v576 = vld [vmem:[#allocation10 + $0x44] sm:$0xf]
        %v577 = vld [vmem:[#allocation10 + $0x48] sm:$0xf]
        %v578 = vld [vmem:[#allocation10 + $0x4c] sm:$0xf]
        %v579 = vld [vmem:[#allocation10 + $0x50] sm:$0xf]
        %v580 = vld [vmem:[#allocation10 + $0x54] sm:$0xf]
        %v581 = vld [vmem:[#allocation10 + $0x58] sm:$0xf]
        %v582 = vld [vmem:[#allocation10 + $0x5c] sm:$0xf]
        %v583 = vld [vmem:[#allocation10 + $0x60] sm:$0xf]
        %v584 = vld [vmem:[#allocation10 + $0x64] sm:$0xf]
        %v585 = vld [vmem:[#allocation10 + $0x68] sm:$0xf]
        %v586 = vld [vmem:[#allocation10 + $0x6c] sm:$0xf]
        %v587 = vld [vmem:[#allocation10 + $0x70] sm:$0xf]
        %v588 = vld [vmem:[#allocation10 + $0x74] sm:$0xf]
        %v589 = vld [vmem:[#allocation10 + $0x78] sm:$0xf]
        %v590 = vld [vmem:[#allocation10 + $0x7c] sm:$0xf]
        %v591 = vld [vmem:[%s5] sm:$0x1]
        %v593 = vlaneseq
        %v594 = vshrl.u32 %v593, 7
        %v595 = vsub.s32 0, %v594
        %v596 = vrot.slane %v591, %v595
        %v598 = vld [vmem:[#allocation2] sm:$0xff]
        %v599 = vld [vmem:[#allocation2 + $0x8] sm:$0xff]
        %v600 = vpack.c.bf16 %v599, %v598
        %v601 = vld [vmem:[#allocation3] sm:$0xff]
        %v602 = vld [vmem:[#allocation3 + $0x8] sm:$0xff]
        %v619 = vunpack.c.l.b16 %v543
        %v620 = vunpack.c.l.b16 %v544
        %v621 = vunpack.c.l.b16 %v545
        %v622 = vunpack.c.l.b16 %v546
        %v623 = vunpack.c.l.b16 %v547
        %v624 = vunpack.c.l.b16 %v548
        %v625 = vunpack.c.l.b16 %v549
        %v626 = vunpack.c.l.b16 %v550
        %v627 = vunpack.c.l.b16 %v551
        %v628 = vunpack.c.l.b16 %v552
        %v629 = vunpack.c.l.b16 %v553
        %v630 = vunpack.c.l.b16 %v554
        %v631 = vunpack.c.l.b16 %v555
        %v632 = vunpack.c.l.b16 %v556
        %v633 = vunpack.c.l.b16 %v557
        %v634 = vunpack.c.l.b16 %v558
        %v635 = vpack.c.b16 %v620, %v619
        %v636 = vpack.c.b16 %v622, %v621
        %v637 = vpack.c.b16 %v624, %v623
        %v638 = vpack.c.b16 %v626, %v625
        %v639 = vpack.c.b16 %v628, %v627
        %v640 = vpack.c.b16 %v630, %v629
        %v641 = vpack.c.b16 %v632, %v631
        %v642 = vpack.c.b16 %v634, %v633
        %651 = vmatprep.subr.bf16.mxu0 0
        %652 = vmatpush1.bf16.msra.mxu0 %v635
        %653 = vmatprep.subr.bf16.mxu0 0
        %654 = vmatpush1.bf16.msra.mxu0 %v636
        %655 = vmatprep.subr.bf16.mxu0 0
        %656 = vmatpush1.bf16.msra.mxu0 %v637
        %657 = vmatprep.subr.bf16.mxu0 0
        %658 = vmatpush1.bf16.msra.mxu0 %v638
        %659 = vmatprep.subr.bf16.mxu0 0
        %660 = vmatpush1.bf16.msra.mxu0 %v639
        %661 = vmatprep.subr.bf16.mxu0 0
        %662 = vmatpush1.bf16.msra.mxu0 %v640
        %663 = vmatprep.subr.bf16.mxu0 0
        %664 = vmatpush1.bf16.msra.mxu0 %v641
        %665 = vmatprep.subr.bf16.mxu0 0
        %666 = vmatpush1.bf16.msra.mxu0 %v642
        %667 = vmatprep.subr.bf16.mxu0 0
        %668 = vmatpush1.bf16.msra.mxu0 0
        %669 = vmatprep.subr.bf16.mxu0 0
        %670 = vmatpush1.bf16.msra.mxu0 0
        %671 = vmatprep.subr.bf16.mxu0 0
        %672 = vmatpush1.bf16.msra.mxu0 0
        %673 = vmatprep.subr.bf16.mxu0 0
        %674 = vmatpush1.bf16.msra.mxu0 0
        %675 = vmatprep.subr.bf16.mxu0 0
        %676 = vmatpush1.bf16.msra.mxu0 0
        %677 = vmatprep.subr.bf16.mxu0 0
        %678 = vmatpush1.bf16.msra.mxu0 0
        %679 = vmatprep.subr.bf16.mxu0 0
        %680 = vmatpush1.bf16.msra.mxu0 0
        %681 = vmatprep.subr.bf16.mxu0 0
        %682 = vmatpush1.bf16.msra.mxu0 0
        %683 = vmatprep.mubr.bf16.mxu0 0
        %684 = vmatmul.mubr.bf16.gmra.mrb[0].mxu0 %v600
        %v685 = vpop.f32.mrb[0].mxu0
        %v686 = vadd.f32 0.0, %v685
        %v687 = vpop.f32.mrb[0].mxu0
        %v688 = vpop.f32.mrb[0].mxu0
        %v689 = vadd.f32 0.0, %v688
        %v690 = vpop.f32.mrb[0].mxu0
        %691 = vdwg.mxu0
        %v692 = vadd.f32 %v601, %v686
        %v693 = vadd.f32 %v602, %v689
        %v694 = vtanh.pop %v692
        %v695 = vtanh.pop %v693
        %696 = vst [vmem:[#allocation2] sm:$0xff] %v694
        %697 = vst [vmem:[#allocation2 + $0x8] sm:$0xff] %v695
        %s698 = scalar_lea.vmem [#allocation2], 16
        %v699 = vld [vmem:[%s698] sm:$0xff]
        %v700 = vld [vmem:[%s698 + $0x8] sm:$0xff]
        %v701 = vpack.c.bf16 %v700, %v699
        %v702 = vpack.c.bf16 %v695, %v694
        %v735 = vunpack.c.l.b16 %v559
        %v736 = vunpack.c.l.b16 %v560
        %v737 = vunpack.c.l.b16 %v561
        %v738 = vunpack.c.l.b16 %v562
        %v739 = vunpack.c.l.b16 %v563
        %v740 = vunpack.c.l.b16 %v564
        %v741 = vunpack.c.l.b16 %v565
        %v742 = vunpack.c.l.b16 %v566
        %v743 = vunpack.c.l.b16 %v567
        %v744 = vunpack.c.l.b16 %v568
        %v745 = vunpack.c.l.b16 %v569
        %v746 = vunpack.c.l.b16 %v570
        %v747 = vunpack.c.l.b16 %v571
        %v748 = vunpack.c.l.b16 %v572
        %v749 = vunpack.c.l.b16 %v573
        %v750 = vunpack.c.l.b16 %v574
        %v751 = vunpack.c.l.b16 %v575
        %v752 = vunpack.c.l.b16 %v576
        %v753 = vunpack.c.l.b16 %v577
        %v754 = vunpack.c.l.b16 %v578
        %v755 = vunpack.c.l.b16 %v579
        %v756 = vunpack.c.l.b16 %v580
        %v757 = vunpack.c.l.b16 %v581
        %v758 = vunpack.c.l.b16 %v582
        %v759 = vunpack.c.l.b16 %v583
        %v760 = vunpack.c.l.b16 %v584
        %v761 = vunpack.c.l.b16 %v585
        %v762 = vunpack.c.l.b16 %v586
        %v763 = vunpack.c.l.b16 %v587
        %v764 = vunpack.c.l.b16 %v588
        %v765 = vunpack.c.l.b16 %v589
        %v766 = vunpack.c.l.b16 %v590
        %v767 = vpack.c.b16 %v736, %v735
        %v768 = vpack.c.b16 %v738, %v737
        %v769 = vpack.c.b16 %v740, %v739
        %v770 = vpack.c.b16 %v742, %v741
        %v771 = vpack.c.b16 %v744, %v743
        %v772 = vpack.c.b16 %v746, %v745
        %v773 = vpack.c.b16 %v748, %v747
        %v774 = vpack.c.b16 %v750, %v749
        %v775 = vpack.c.b16 %v752, %v751
        %v776 = vpack.c.b16 %v754, %v753
        %v777 = vpack.c.b16 %v756, %v755
        %v778 = vpack.c.b16 %v758, %v757
        %v779 = vpack.c.b16 %v760, %v759
        %v780 = vpack.c.b16 %v762, %v761
        %v781 = vpack.c.b16 %v764, %v763
        %v782 = vpack.c.b16 %v766, %v765
        %799 = vmatprep.subr.bf16.mxu0 0
        %800 = vmatpush1.bf16.msra.mxu0 %v767
        %801 = vmatprep.subr.bf16.mxu0 0
        %802 = vmatpush1.bf16.msra.mxu0 %v768
        %803 = vmatprep.subr.bf16.mxu0 0
        %804 = vmatpush1.bf16.msra.mxu0 %v769
        %805 = vmatprep.subr.bf16.mxu0 0
        %806 = vmatpush1.bf16.msra.mxu0 %v770
        %807 = vmatprep.subr.bf16.mxu0 0
        %808 = vmatpush1.bf16.msra.mxu0 %v771
        %809 = vmatprep.subr.bf16.mxu0 0
        %810 = vmatpush1.bf16.msra.mxu0 %v772
        %811 = vmatprep.subr.bf16.mxu0 0
        %812 = vmatpush1.bf16.msra.mxu0 %v773
        %813 = vmatprep.subr.bf16.mxu0 0
        %814 = vmatpush1.bf16.msra.mxu0 %v774
        %815 = vmatprep.subr.bf16.mxu0 0
        %816 = vmatpush1.bf16.msra.mxu0 %v775
        %817 = vmatprep.subr.bf16.mxu0 0
        %818 = vmatpush1.bf16.msra.mxu0 %v776
        %819 = vmatprep.subr.bf16.mxu0 0
        %820 = vmatpush1.bf16.msra.mxu0 %v777
        %821 = vmatprep.subr.bf16.mxu0 0
        %822 = vmatpush1.bf16.msra.mxu0 %v778
        %823 = vmatprep.subr.bf16.mxu0 0
        %824 = vmatpush1.bf16.msra.mxu0 %v779
        %825 = vmatprep.subr.bf16.mxu0 0
        %826 = vmatpush1.bf16.msra.mxu0 %v780
        %827 = vmatprep.subr.bf16.mxu0 0
        %828 = vmatpush1.bf16.msra.mxu0 %v781
        %829 = vmatprep.subr.bf16.mxu0 0
        %830 = vmatpush1.bf16.msra.mxu0 %v782
        %831 = vmatprep.mubr.bf16.mxu0 %v701
        %832 = vmatmul.mubr.bf16.gmra.mrb[0].mxu0 %v702
        %v833 = vpop.f32.mrb[0].mxu0
        %v834 = vadd.f32 %v596, %v833
        %v835 = vpop.f32.mrb[0].mxu0
        %v836 = vpop.f32.mrb[0].mxu0
        %v837 = vadd.f32 %v596, %v836
        %v838 = vpop.f32.mrb[0].mxu0
        %839 = vdwg.mxu0
        %v840 = vtanh.pop %v834
        %v841 = vtanh.pop %v837
        %842 = vst [vmem:[%s698] sm:$0xff] %v840
        %843 = vst [vmem:[%s698 + $0x8] sm:$0xff] %v841
        %v844 = vld [vmem:[#allocation2] sm:$0xff]
        %v845 = vld [vmem:[#allocation2 + $0x8] sm:$0xff]
        %v846 = vpack.c.bf16 %v845, %v844
        %s847 = scalar_lea.vmem [#allocation3], 16
        %v848 = vld [vmem:[%s847] sm:$0xff]
        %v849 = vld [vmem:[%s847 + $0x8] sm:$0xff]
        %850 = vmatprep.subr.bf16.mxu0 0
        %851 = vmatpush1.bf16.msra.mxu0 %v635
        %852 = vmatprep.subr.bf16.mxu0 0
        %853 = vmatpush1.bf16.msra.mxu0 %v636
        %854 = vmatprep.subr.bf16.mxu0 0
        %855 = vmatpush1.bf16.msra.mxu0 %v637
        %856 = vmatprep.subr.bf16.mxu0 0
        %857 = vmatpush1.bf16.msra.mxu0 %v638
        %858 = vmatprep.subr.bf16.mxu0 0
        %859 = vmatpush1.bf16.msra.mxu0 %v639
        %860 = vmatprep.subr.bf16.mxu0 0
        %861 = vmatpush1.bf16.msra.mxu0 %v640
        %862 = vmatprep.subr.bf16.mxu0 0
        %863 = vmatpush1.bf16.msra.mxu0 %v641
        %864 = vmatprep.subr.bf16.mxu0 0
        %865 = vmatpush1.bf16.msra.mxu0 %v642
        %866 = vmatprep.subr.bf16.mxu0 0
        %867 = vmatpush1.bf16.msra.mxu0 0
        %868 = vmatprep.subr.bf16.mxu0 0
        %869 = vmatpush1.bf16.msra.mxu0 0
        %870 = vmatprep.subr.bf16.mxu0 0
        %871 = vmatpush1.bf16.msra.mxu0 0
        %872 = vmatprep.subr.bf16.mxu0 0
        %873 = vmatpush1.bf16.msra.mxu0 0
        %874 = vmatprep.subr.bf16.mxu0 0
        %875 = vmatpush1.bf16.msra.mxu0 0
        %876 = vmatprep.subr.bf16.mxu0 0
        %877 = vmatpush1.bf16.msra.mxu0 0
        %878 = vmatprep.subr.bf16.mxu0 0
        %879 = vmatpush1.bf16.msra.mxu0 0
        %880 = vmatprep.subr.bf16.mxu0 0
        %881 = vmatpush1.bf16.msra.mxu0 0
        %882 = vmatprep.mubr.bf16.mxu0 0
        %883 = vmatmul.mubr.bf16.gmra.mrb[0].mxu0 %v846
        %v884 = vpop.f32.mrb[0].mxu0
        %v885 = vadd.f32 0.0, %v884
        %v886 = vpop.f32.mrb[0].mxu0
        %v887 = vpop.f32.mrb[0].mxu0
        %v888 = vadd.f32 0.0, %v887
        %v889 = vpop.f32.mrb[0].mxu0
        %890 = vdwg.mxu0
        %v891 = vadd.f32 %v848, %v885
        %v892 = vadd.f32 %v849, %v888
        %v893 = vtanh.pop %v891
        %v894 = vtanh.pop %v892
        %895 = vst [vmem:[#allocation2] sm:$0xff] %v893
        %896 = vst [vmem:[#allocation2 + $0x8] sm:$0xff] %v894
        %v897 = vld [vmem:[%s698] sm:$0xff]
        %v898 = vld [vmem:[%s698 + $0x8] sm:$0xff]
        %v899 = vpack.c.bf16 %v898, %v897
        %v900 = vpack.c.bf16 %v894, %v893
        %901 = vmatprep.subr.bf16.mxu0 0
        %902 = vmatpush1.bf16.msra.mxu0 %v767
        %903 = vmatprep.subr.bf16.mxu0 0
        %904 = vmatpush1.bf16.msra.mxu0 %v768
        %905 = vmatprep.subr.bf16.mxu0 0
        %906 = vmatpush1.bf16.msra.mxu0 %v769
        %907 = vmatprep.subr.bf16.mxu0 0
        %908 = vmatpush1.bf16.msra.mxu0 %v770
        %909 = vmatprep.subr.bf16.mxu0 0
        %910 = vmatpush1.bf16.msra.mxu0 %v771
        %911 = vmatprep.subr.bf16.mxu0 0
        %912 = vmatpush1.bf16.msra.mxu0 %v772
        %913 = vmatprep.subr.bf16.mxu0 0
        %914 = vmatpush1.bf16.msra.mxu0 %v773
        %915 = vmatprep.subr.bf16.mxu0 0
        %916 = vmatpush1.bf16.msra.mxu0 %v774
        %917 = vmatprep.subr.bf16.mxu0 0
        %918 = vmatpush1.bf16.msra.mxu0 %v775
        %919 = vmatprep.subr.bf16.mxu0 0
        %920 = vmatpush1.bf16.msra.mxu0 %v776
        %921 = vmatprep.subr.bf16.mxu0 0
        %922 = vmatpush1.bf16.msra.mxu0 %v777
        %923 = vmatprep.subr.bf16.mxu0 0
        %924 = vmatpush1.bf16.msra.mxu0 %v778
        %925 = vmatprep.subr.bf16.mxu0 0
        %926 = vmatpush1.bf16.msra.mxu0 %v779
        %927 = vmatprep.subr.bf16.mxu0 0
        %928 = vmatpush1.bf16.msra.mxu0 %v780
        %929 = vmatprep.subr.bf16.mxu0 0
        %930 = vmatpush1.bf16.msra.mxu0 %v781
        %931 = vmatprep.subr.bf16.mxu0 0
        %932 = vmatpush1.bf16.msra.mxu0 %v782
        %933 = vmatprep.mubr.bf16.mxu0 %v899
        %934 = vmatmul.mubr.bf16.gmra.mrb[0].mxu0 %v900
        %v935 = vpop.f32.mrb[0].mxu0
        %v936 = vadd.f32 %v596, %v935
        %v937 = vpop.f32.mrb[0].mxu0
        %v938 = vpop.f32.mrb[0].mxu0
        %v939 = vadd.f32 %v596, %v938
        %v940 = vpop.f32.mrb[0].mxu0
        %941 = vdwg.mxu0
        %v942 = vtanh.pop %v936
        %v943 = vtanh.pop %v939
        %944 = vst [vmem:[%s698] sm:$0xff] %v942
        %945 = vst [vmem:[%s698 + $0x8] sm:$0xff] %v943
        %v946 = vld [vmem:[#allocation2] sm:$0xff]
        %v947 = vld [vmem:[#allocation2 + $0x8] sm:$0xff]
        %v948 = vpack.c.bf16 %v947, %v946
        %s949 = scalar_lea.vmem [#allocation3], 32
        %v950 = vld [vmem:[%s949] sm:$0xff]
        %v951 = vld [vmem:[%s949 + $0x8] sm:$0xff]
        %952 = vmatprep.subr.bf16.mxu0 0
        %953 = vmatpush1.bf16.msra.mxu0 %v635
        %954 = vmatprep.subr.bf16.mxu0 0
        %955 = vmatpush1.bf16.msra.mxu0 %v636
        %956 = vmatprep.subr.bf16.mxu0 0
        %957 = vmatpush1.bf16.msra.mxu0 %v637
        %958 = vmatprep.subr.bf16.mxu0 0
        %959 = vmatpush1.bf16.msra.mxu0 %v638
        %960 = vmatprep.subr.bf16.mxu0 0
        %961 = vmatpush1.bf16.msra.mxu0 %v639
        %962 = vmatprep.subr.bf16.mxu0 0
        %963 = vmatpush1.bf16.msra.mxu0 %v640
        %964 = vmatprep.subr.bf16.mxu0 0
        %965 = vmatpush1.bf16.msra.mxu0 %v641
        %966 = vmatprep.subr.bf16.mxu0 0
        %967 = vmatpush1.bf16.msra.mxu0 %v642
        %968 = vmatprep.subr.bf16.mxu0 0
        %969 = vmatpush1.bf16.msra.mxu0 0
        %970 = vmatprep.subr.bf16.mxu0 0
        %971 = vmatpush1.bf16.msra.mxu0 0
        %972 = vmatprep.subr.bf16.mxu0 0
        %973 = vmatpush1.bf16.msra.mxu0 0
        %974 = vmatprep.subr.bf16.mxu0 0
        %975 = vmatpush1.bf16.msra.mxu0 0
        %976 = vmatprep.subr.bf16.mxu0 0
        %977 = vmatpush1.bf16.msra.mxu0 0
        %978 = vmatprep.subr.bf16.mxu0 0
        %979 = vmatpush1.bf16.msra.mxu0 0
        %980 = vmatprep.subr.bf16.mxu0 0
        %981 = vmatpush1.bf16.msra.mxu0 0
        %982 = vmatprep.subr.bf16.mxu0 0
        %983 = vmatpush1.bf16.msra.mxu0 0
        %984 = vmatprep.mubr.bf16.mxu0 0
        %985 = vmatmul.mubr.bf16.gmra.mrb[0].mxu0 %v948
        %v986 = vpop.f32.mrb[0].mxu0
        %v987 = vadd.f32 0.0, %v986
        %v988 = vpop.f32.mrb[0].mxu0
        %v989 = vpop.f32.mrb[0].mxu0
        %v990 = vadd.f32 0.0, %v989
        %v991 = vpop.f32.mrb[0].mxu0
        %992 = vdwg.mxu0
        %v993 = vadd.f32 %v950, %v987
        %v994 = vadd.f32 %v951, %v990
        %v995 = vtanh.pop %v993
        %v996 = vtanh.pop %v994
        %997 = vst [vmem:[#allocation2] sm:$0xff] %v995
        %998 = vst [vmem:[#allocation2 + $0x8] sm:$0xff] %v996
        %v999 = vld [vmem:[%s698] sm:$0xff]
        %v1000 = vld [vmem:[%s698 + $0x8] sm:$0xff]
        %v1001 = vpack.c.bf16 %v1000, %v999
        %v1002 = vpack.c.bf16 %v996, %v995
        %1003 = vmatprep.subr.bf16.mxu0 0
        %1004 = vmatpush1.bf16.msra.mxu0 %v767
        %1005 = vmatprep.subr.bf16.mxu0 0
        %1006 = vmatpush1.bf16.msra.mxu0 %v768
        %1007 = vmatprep.subr.bf16.mxu0 0
        %1008 = vmatpush1.bf16.msra.mxu0 %v769
        %1009 = vmatprep.subr.bf16.mxu0 0
        %1010 = vmatpush1.bf16.msra.mxu0 %v770
        %1011 = vmatprep.subr.bf16.mxu0 0
        %1012 = vmatpush1.bf16.msra.mxu0 %v771
        %1013 = vmatprep.subr.bf16.mxu0 0
        %1014 = vmatpush1.bf16.msra.mxu0 %v772
        %1015 = vmatprep.subr.bf16.mxu0 0
        %1016 = vmatpush1.bf16.msra.mxu0 %v773
        %1017 = vmatprep.subr.bf16.mxu0 0
        %1018 = vmatpush1.bf16.msra.mxu0 %v774
        %1019 = vmatprep.subr.bf16.mxu0 0
        %1020 = vmatpush1.bf16.msra.mxu0 %v775
        %1021 = vmatprep.subr.bf16.mxu0 0
        %1022 = vmatpush1.bf16.msra.mxu0 %v776
        %1023 = vmatprep.subr.bf16.mxu0 0
        %1024 = vmatpush1.bf16.msra.mxu0 %v777
        %1025 = vmatprep.subr.bf16.mxu0 0
        %1026 = vmatpush1.bf16.msra.mxu0 %v778
        %1027 = vmatprep.subr.bf16.mxu0 0
        %1028 = vmatpush1.bf16.msra.mxu0 %v779
        %1029 = vmatprep.subr.bf16.mxu0 0
        %1030 = vmatpush1.bf16.msra.mxu0 %v780
        %1031 = vmatprep.subr.bf16.mxu0 0
        %1032 = vmatpush1.bf16.msra.mxu0 %v781
        %1033 = vmatprep.subr.bf16.mxu0 0
        %1034 = vmatpush1.bf16.msra.mxu0 %v782
        %1035 = vmatprep.mubr.bf16.mxu0 %v1001
        %1036 = vmatmul.mubr.bf16.gmra.mrb[0].mxu0 %v1002
        %v1037 = vpop.f32.mrb[0].mxu0
        %v1038 = vadd.f32 %v596, %v1037
        %v1039 = vpop.f32.mrb[0].mxu0
        %v1040 = vpop.f32.mrb[0].mxu0
        %v1041 = vadd.f32 %v596, %v1040
        %v1042 = vpop.f32.mrb[0].mxu0
        %1043 = vdwg.mxu0
        %v1044 = vtanh.pop %v1038
        %v1045 = vtanh.pop %v1041
        %1046 = vst [vmem:[%s698] sm:$0xff] %v1044
        %1047 = vst [vmem:[%s698 + $0x8] sm:$0xff] %v1045
        %v1048 = vld [vmem:[#allocation2] sm:$0xff]
        %v1049 = vld [vmem:[#allocation2 + $0x8] sm:$0xff]
        %v1050 = vpack.c.bf16 %v1049, %v1048
        %s1051 = scalar_lea.vmem [#allocation3], 48
        %v1052 = vld [vmem:[%s1051] sm:$0xff]
        %v1053 = vld [vmem:[%s1051 + $0x8] sm:$0xff]
        %1054 = vmatprep.subr.bf16.mxu0 0
        %1055 = vmatpush1.bf16.msra.mxu0 %v635
        %1056 = vmatprep.subr.bf16.mxu0 0
        %1057 = vmatpush1.bf16.msra.mxu0 %v636
        %1058 = vmatprep.subr.bf16.mxu0 0
        %1059 = vmatpush1.bf16.msra.mxu0 %v637
        %1060 = vmatprep.subr.bf16.mxu0 0
        %1061 = vmatpush1.bf16.msra.mxu0 %v638
        %1062 = vmatprep.subr.bf16.mxu0 0
        %1063 = vmatpush1.bf16.msra.mxu0 %v639
        %1064 = vmatprep.subr.bf16.mxu0 0
        %1065 = vmatpush1.bf16.msra.mxu0 %v640
        %1066 = vmatprep.subr.bf16.mxu0 0
        %1067 = vmatpush1.bf16.msra.mxu0 %v641
        %1068 = vmatprep.subr.bf16.mxu0 0
        %1069 = vmatpush1.bf16.msra.mxu0 %v642
        %1070 = vmatprep.subr.bf16.mxu0 0
        %1071 = vmatpush1.bf16.msra.mxu0 0
        %1072 = vmatprep.subr.bf16.mxu0 0
        %1073 = vmatpush1.bf16.msra.mxu0 0
        %1074 = vmatprep.subr.bf16.mxu0 0
        %1075 = vmatpush1.bf16.msra.mxu0 0
        %1076 = vmatprep.subr.bf16.mxu0 0
        %1077 = vmatpush1.bf16.msra.mxu0 0
        %1078 = vmatprep.subr.bf16.mxu0 0
        %1079 = vmatpush1.bf16.msra.mxu0 0
        %1080 = vmatprep.subr.bf16.mxu0 0
        %1081 = vmatpush1.bf16.msra.mxu0 0
        %1082 = vmatprep.subr.bf16.mxu0 0
        %1083 = vmatpush1.bf16.msra.mxu0 0
        %1084 = vmatprep.subr.bf16.mxu0 0
        %1085 = vmatpush1.bf16.msra.mxu0 0
        %1086 = vmatprep.mubr.bf16.mxu0 0
        %1087 = vmatmul.mubr.bf16.gmra.mrb[0].mxu0 %v1050
        %v1088 = vpop.f32.mrb[0].mxu0
        %v1089 = vadd.f32 0.0, %v1088
        %v1090 = vpop.f32.mrb[0].mxu0
        %v1091 = vpop.f32.mrb[0].mxu0
        %v1092 = vadd.f32 0.0, %v1091
        %v1093 = vpop.f32.mrb[0].mxu0
        %1094 = vdwg.mxu0
        %v1095 = vadd.f32 %v1052, %v1089
        %v1096 = vadd.f32 %v1053, %v1092
        %v1097 = vtanh.pop %v1095
        %v1098 = vtanh.pop %v1096
        %1099 = vst [vmem:[#allocation2] sm:$0xff] %v1097
        %1100 = vst [vmem:[#allocation2 + $0x8] sm:$0xff] %v1098
        %v1101 = vld [vmem:[%s698] sm:$0xff]
        %v1102 = vld [vmem:[%s698 + $0x8] sm:$0xff]
        %v1103 = vpack.c.bf16 %v1102, %v1101
        %v1104 = vpack.c.bf16 %v1098, %v1097
        %1105 = vmatprep.subr.bf16.mxu0 0
        %1106 = vmatpush1.bf16.msra.mxu0 %v767
        %1107 = vmatprep.subr.bf16.mxu0 0
        %1108 = vmatpush1.bf16.msra.mxu0 %v768
        %1109 = vmatprep.subr.bf16.mxu0 0
        %1110 = vmatpush1.bf16.msra.mxu0 %v769
        %1111 = vmatprep.subr.bf16.mxu0 0
        %1112 = vmatpush1.bf16.msra.mxu0 %v770
        %1113 = vmatprep.subr.bf16.mxu0 0
        %1114 = vmatpush1.bf16.msra.mxu0 %v771
        %1115 = vmatprep.subr.bf16.mxu0 0
        %1116 = vmatpush1.bf16.msra.mxu0 %v772
        %1117 = vmatprep.subr.bf16.mxu0 0
        %1118 = vmatpush1.bf16.msra.mxu0 %v773
        %1119 = vmatprep.subr.bf16.mxu0 0
        %1120 = vmatpush1.bf16.msra.mxu0 %v774
        %1121 = vmatprep.subr.bf16.mxu0 0
        %1122 = vmatpush1.bf16.msra.mxu0 %v775
        %1123 = vmatprep.subr.bf16.mxu0 0
        %1124 = vmatpush1.bf16.msra.mxu0 %v776
        %1125 = vmatprep.subr.bf16.mxu0 0
        %1126 = vmatpush1.bf16.msra.mxu0 %v777
        %1127 = vmatprep.subr.bf16.mxu0 0
        %1128 = vmatpush1.bf16.msra.mxu0 %v778
        %1129 = vmatprep.subr.bf16.mxu0 0
        %1130 = vmatpush1.bf16.msra.mxu0 %v779
        %1131 = vmatprep.subr.bf16.mxu0 0
        %1132 = vmatpush1.bf16.msra.mxu0 %v780
        %1133 = vmatprep.subr.bf16.mxu0 0
        %1134 = vmatpush1.bf16.msra.mxu0 %v781
        %1135 = vmatprep.subr.bf16.mxu0 0
        %1136 = vmatpush1.bf16.msra.mxu0 %v782
        %1137 = vmatprep.mubr.bf16.mxu0 %v1103
        %1138 = vmatmul.mubr.bf16.gmra.mrb[0].mxu0 %v1104
        %v1139 = vpop.f32.mrb[0].mxu0
        %v1140 = vadd.f32 %v596, %v1139
        %v1141 = vpop.f32.mrb[0].mxu0
        %v1142 = vpop.f32.mrb[0].mxu0
        %v1143 = vadd.f32 %v596, %v1142
        %v1144 = vpop.f32.mrb[0].mxu0
        %1145 = vdwg.mxu0
        %v1146 = vtanh.pop %v1140
        %v1147 = vtanh.pop %v1143
        %1148 = vst [vmem:[%s698] sm:$0xff] %v1146
        %1149 = vst [vmem:[%s698 + $0x8] sm:$0xff] %v1147
        %p1150 = scmp.eq.s32.totalorder %s26, 1
        // Predicated region
        $region73: #{tpu_custom_call.1} parent=51 // pred_check
          %p1151 = pneg %p1150
        $region74: #{tpu_custom_call.1} parent=51 // pred_check_branch
          %1153 = sbr.rel (%p1151) target = $region76
        $region75: #{tpu_custom_call.1} parent=51 // pred_region
          %v1154 = vld [vmem:[%s698] sm:$0xff]
          %v1155 = vld [vmem:[%s698 + $0x8] sm:$0xff]
          %v1156 = vld [vmem:[%s6] sm:$0x1]
          %v1158 = vlaneseq
          %v1159 = vshrl.u32 %v1158, 7
          %v1160 = vsub.s32 0, %v1159
          %v1161 = vrot.slane %v1156, %v1160
          %v1163 = vmul.f32 %v1154, %v1161
          %v1164 = vmul.f32 %v1155, %v1161
          %1165 = vadd.xlane.f32.xlu0 %v1163
          %v1166 = vpop.xlane.xlu0 %1165
          %1167 = vadd.xlane.f32.xlu0 %v1164
          %v1168 = vpop.xlane.xlu0 %1167
          %v1169 = vld [vmem:[#allocation4] sm:$0x1]
          %v1171 = vlaneseq
          %v1172 = vshrl.u32 %v1171, 7
          %v1173 = vsub.s32 0, %v1172
          %v1174 = vrot.slane %v1169, %v1173
          %v1176 = vadd.f32 %v1166, %v1174
          %v1177 = vadd.f32 %v1168, %v1174
          %vm1178 = vcmask 7168
          %1179 = vst.msk [vmem:[%s8] sm:$0xff] %vm1178, %v1176
          %1180 = vst.msk [vmem:[%s8 + $0x8] sm:$0xff] %vm1178, %v1177
        $region76: #{tpu_custom_call.1} parent=51 // pred_fallthru
          _
        // Predicated region
        $region77: #{tpu_custom_call.1} parent=51 // pred_check
          %p1181 = pneg %p212
        $region78: #{tpu_custom_call.1} parent=51 // pred_check_branch
          %1183 = sbr.rel (%p1181) target = $region80
        $region79: #{tpu_custom_call.1} parent=51 // pred_region
          _
        $region80: #{tpu_custom_call.1} parent=51 // pred_fallthru
          _
        // Predicated region
        $region81: #{tpu_custom_call.1} parent=51 // pred_check
          %p1184 = pneg %p212
        $region82: #{tpu_custom_call.1} parent=51 // pred_check_branch
          %1186 = sbr.rel (%p1184) target = $region84
        $region83: #{tpu_custom_call.1} parent=51 // pred_region
          _
        $region84: #{tpu_custom_call.1} parent=51 // pred_fallthru
          _
      $region52: #{tpu_custom_call.1} parent=5 // pred_fallthru
        _
      %p1187 = scmp.le.s32.totalorder 2, %s21
      // Predicated region
      $region85: #{tpu_custom_call.1} parent=5 // pred_check
        %p1188 = pneg %p1187
      $region86: #{tpu_custom_call.1} parent=5 // pred_check_branch
        %1190 = sbr.rel (%p1188) target = $region88
      $region87: #{tpu_custom_call.1} parent=5 // pred_region
        %s1191 = ssub.s32 %s21, 2
      $region88: #{tpu_custom_call.1} parent=5 // pred_fallthru
        _
    $region6: #{tpu_custom_call.1} parent=1 // loop_footer
      %s25 = sadd.s32 1, %s21
    $region7: #{tpu_custom_call.1} parent=1 // loop_footer_branch
      %20 = sbr.rel target = $region3
    $region8: #{tpu_custom_call.1} parent=1 // loop_exit
      _
    %1192 = vsyncpa [#allocation6], 1
    %s1193 = scalar_lea.sflag [#allocation6], 1
    %1194 = vsyncpa %s1193, 1
    %1195 = vsyncpa [#allocation8], 1
    %1196 = vsyncpa [#allocation11], 1

</llo_original>
